<compile_context>
chip_gen: v7x
topology: tpu7x:2x2x1
jax: 0.10.0
libtpu: 0.0.40
codegen_flags: <defaults>
</compile_context>

<pallas_src>
import jax
import jax.numpy as jnp
from jax import lax
from jax.experimental import pallas as pl
from jax.experimental.pallas import tpu as pltpu

LN_EPS = 1e-5                 # PyTorch nn.LayerNorm default eps
_SQRT_HALF = 0.7071067811865476

# Per-layer (stacked) parameter order used by the fused kernel.
LAYER_KEYS = ("g1", "be1", "tw1t", "tb1", "tw2t", "tb2",
              "g2", "be2", "cw1", "cb1", "cw2", "cb2")


# ----------------------------- in-kernel helpers -----------------------------
def _gelu_exact(x):
    # nn.GELU() default is the exact (erf-based) GELU.
    return 0.5 * x * (1.0 + lax.erf(x * _SQRT_HALF))


def _layernorm_rows(x2d, gamma, beta):
    # One-pass statistics: sum and sum-of-squares (single sweep of the lane axis
    # each, no (x - mu)**2 intermediate).
    inv_d = 1.0 / x2d.shape[-1]
    s1 = jnp.sum(x2d, axis=-1, keepdims=True)
    s2 = jnp.sum(x2d * x2d, axis=-1, keepdims=True)
    mu = s1 * inv_d
    var = jnp.maximum(s2 * inv_d - mu * mu, 0.0)
    return (x2d - mu) * lax.rsqrt(var + LN_EPS) * gamma + beta


# ------------------------------ fused Pallas kernel ---------------------------
def mixer_fused_kernel(patches_ref, pw_ref, pb_ref,
                       g1_ref, be1_ref, tw1t_ref, tb1_ref, tw2t_ref, tb2_ref,
                       g2_ref, be2_ref, cw1_ref, cb1_ref, cw2_ref, cb2_ref,
                       hw_ref, hb_ref,
                       logits_ref,
                       act_ref):
    layer = pl.program_id(1)
    depth = pl.num_programs(1)
    Bblk, S, D = act_ref.shape

    # ---- patch embedding: only on the first depth step; result stays in VMEM ----
    @pl.when(layer == 0)
    def _():
        P = patches_ref.shape[-1]
        p2d = patches_ref[...].reshape(Bblk * S, P)
        x0 = jnp.dot(p2d, pw_ref[...], preferred_element_type=jnp.float32) + pb_ref[...]
        act_ref[...] = x0.reshape(Bblk, S, D)

    x = act_ref[...]                                   # (Bblk, S, D), VMEM resident

    g1, be1 = g1_ref[0], be1_ref[0]                    # (1, D)
    g2, be2 = g2_ref[0], be2_ref[0]                    # (1, D)
    tw1t = tw1t_ref[0]                                 # (T, S)  == W1^T (pre-transposed)
    tw2t = tw2t_ref[0]                                 # (S, T)  == W2^T (pre-transposed)
    tb1 = tb1_ref[0]                                   # (T, 1)
    tb2 = tb2_ref[0]                                   # (S, 1)
    cw1, cb1 = cw1_ref[0], cb1_ref[0]                  # (D, C), (1, C)
    cw2, cb2 = cw2_ref[0], cb2_ref[0]                  # (C, D), (1, D)
    T = tw1t.shape[0]

    # ---- token mixing: x + MLP(LN(x)^T)^T, with the transposes folded into the
    # weight layout (both matmuls are plain NN, outputs already (T,D)/(S,D)) ----
    xn = _layernorm_rows(x.reshape(Bblk * S, D), g1, be1).reshape(Bblk, S, D)
    tb1b = jnp.broadcast_to(tb1, (T, D))               # hoisted out of the batch loop
    tb2b = jnp.broadcast_to(tb2, (S, D))
    rows = []
    for bi in range(Bblk):                             # static unroll (Bblk small)
        h = jnp.dot(tw1t, xn[bi], preferred_element_type=jnp.float32) + tb1b   # (T, D)
        h = _gelu_exact(h)
        y = jnp.dot(tw2t, h, preferred_element_type=jnp.float32) + tb2b        # (S, D)
        rows.append(x[bi] + y)                         # residual fused in-loop
    x = jnp.stack(rows, axis=0)                        # (Bblk, S, D)

    # ---- channel mixing: batch folded into the matmul M dimension ----
    x2d = x.reshape(Bblk * S, D)
    xn2 = _layernorm_rows(x2d, g2, be2)                                          # (Bblk*S, D)
    h2 = _gelu_exact(jnp.dot(xn2, cw1, preferred_element_type=jnp.float32) + cb1)
    y2 = jnp.dot(h2, cw2, preferred_element_type=jnp.float32) + cb2
    x = (x2d + y2).reshape(Bblk, S, D)

    # ---- carry activations for the next layer (dead on the final step) ----
    @pl.when(layer < depth - 1)
    def _():
        act_ref[...] = x

    # ---- fused classifier head on the last depth step ----
    @pl.when(layer == depth - 1)
    def _():
        pooled = jnp.mean(x, axis=1)                   # (Bblk, D)
        logits_ref[0] = (jnp.dot(pooled, hw_ref[...],
                                 preferred_element_type=jnp.float32) + hb_ref[...])


# ----------------------------- pallas_call wrapper ----------------------------
def _largest_divisor_leq(n, cap):
    for d in range(min(n, cap), 0, -1):
        if n % d == 0:
            return d
    return 1


def mlp_mixer_forward(x_nchw, params, *, patch_size, b_block=None):
    """Forward pass of MLP_Mixer. x_nchw: (B, C, H, W) float32."""
    B, C, H, W = x_nchw.shape
    p = patch_size
    gh, gw = H // p, W // p
    S = gh * gw
    # NCHW image -> per-patch vectors (B, S, C*p*p); identical to stride=p Conv2d
    # followed by flatten(2).transpose(1, 2) when proj_w is laid out C-major.
    patches = (x_nchw.reshape(B, C, gh, p, gw, p)
                      .transpose(0, 2, 4, 1, 3, 5)
                      .reshape(B, S, C * p * p))
    P = patches.shape[-1]

    D = params["proj_w"].shape[1]
    NC = params["head_w"].shape[1]
    depth = params["tw1t"].shape[0]

    if b_block is None:
        b_block = _largest_divisor_leq(B, 8)   # several batch rows per grid step
    assert B % b_block == 0
    nb = B // b_block

    def batch_spec(block_shape):
        nz = len(block_shape) - 1
        return pl.BlockSpec(block_shape, lambda b, l, _nz=nz: (b,) + (0,) * _nz)

    def layer_spec(full_shape):
        block = (1,) + tuple(full_shape[1:])
        nz = len(full_shape) - 1
        return pl.BlockSpec(block, lambda b, l, _nz=nz: (l,) + (0,) * _nz)

    def const_spec(full_shape):
        n = len(full_shape)
        return pl.BlockSpec(tuple(full_shape), lambda b, l, _n=n: (0,) * _n)

    in_specs = ([batch_spec((b_block, S, P)),
                 const_spec(params["proj_w"].shape),
                 const_spec(params["proj_b"].shape)]
                + [layer_spec(params[k].shape) for k in LAYER_KEYS]
                + [const_spec(params["head_w"].shape),
                   const_spec(params["head_b"].shape)])

    out = pl.pallas_call(
        mixer_fused_kernel,
        out_shape=jax.ShapeDtypeStruct((nb, b_block, NC), jnp.float32),
        grid=(nb, depth),
        in_specs=in_specs,
        out_specs=pl.BlockSpec((1, b_block, NC), lambda b, l: (b, 0, 0)),
        scratch_shapes=[pltpu.VMEM((b_block, S, D), jnp.float32)],
        compiler_params=pltpu.CompilerParams(
            dimension_semantics=("parallel", "arbitrary")),
    )(patches, params["proj_w"], params["proj_b"],
      *[params[k] for k in LAYER_KEYS],
      params["head_w"], params["head_b"])

    return out.reshape(B, NC)


# ------------------------------- parameters -----------------------------------
def init_params(key, *, dim, depth, image_size, patch_size, in_channels, num_classes,
                mlp_ratio=(0.5, 4)):
    grid_size = image_size // patch_size
    S = grid_size * grid_size
    token_dim = int(dim * mlp_ratio[0])
    channel_dim = int(dim * mlp_ratio[1])
    P = in_channels * patch_size * patch_size

    def dense(k, w_shape, b_shape):
        kw, kb = jax.random.split(k)
        w = jax.random.normal(kw, w_shape, jnp.float32) * 0.02
        b = jax.random.normal(kb, b_shape, jnp.float32) * 0.02
        return w, b

    keys = jax.random.split(key, 6)
    params = {}
    params["proj_w"], params["proj_b"] = dense(keys[0], (P, dim), (1, dim))

    # Per-layer weights stacked along a leading `depth` axis so the fused kernel
    # streams one layer per grid step.  Token-MLP weights are stored TRANSPOSED
    # (tw1t = W1^T, tw2t = W2^T) so the kernel needs no activation transposes;
    # their biases are stored as column vectors for the same reason.
    params["tw1t"], tb1 = dense(keys[1], (depth, token_dim, S), (depth, 1, token_dim))
    params["tb1"] = tb1.transpose(0, 2, 1)                     # (depth, token_dim, 1)
    params["tw2t"], tb2 = dense(keys[2], (depth, S, token_dim), (depth, 1, S))
    params["tb2"] = tb2.transpose(0, 2, 1)                     # (depth, S, 1)
    params["cw1"], params["cb1"] = dense(keys[3], (depth, dim, channel_dim),
                                         (depth, 1, channel_dim))
    params["cw2"], params["cb2"] = dense(keys[4], (depth, channel_dim, dim),
                                         (depth, 1, dim))
    params["g1"] = jnp.ones((depth, 1, dim), jnp.float32)
    params["be1"] = jnp.zeros((depth, 1, dim), jnp.float32)
    params["g2"] = jnp.ones((depth, 1, dim), jnp.float32)
    params["be2"] = jnp.zeros((depth, 1, dim), jnp.float32)

    params["head_w"], params["head_b"] = dense(keys[5], (dim, num_classes),
                                               (1, num_classes))
    return params


# --------------------------- pure-JAX reference (check) ------------------------
def mlp_mixer_reference(x_nchw, params, *, patch_size):
    B, C, H, W = x_nchw.shape
    p = patch_size
    gh, gw = H // p, W // p
    patches = (x_nchw.reshape(B, C, gh, p, gw, p)
                      .transpose(0, 2, 4, 1, 3, 5)
                      .reshape(B, gh * gw, C * p * p))
    hp = lax.Precision.HIGHEST

    def ln(v, g, b):
        mu = jnp.mean(v, axis=-1, keepdims=True)
        var = jnp.mean((v - mu) ** 2, axis=-1, keepdims=True)
        return (v - mu) / jnp.sqrt(var + LN_EPS) * g + b

    def gelu(v):
        return 0.5 * v * (1.0 + lax.erf(v * _SQRT_HALF))

    x = jnp.dot(patches, params["proj_w"], precision=hp) + params["proj_b"]
    depth = params["tw1t"].shape[0]
    for l in range(depth):
        xn = ln(x, params["g1"][l], params["be1"][l])
        t = jnp.swapaxes(xn, 1, 2)                                     # (B, D, S)
        h = gelu(jnp.einsum("bds,ts->bdt", t, params["tw1t"][l], precision=hp)
                 + params["tb1"][l].reshape(1, 1, -1))
        t2 = (jnp.einsum("bdt,st->bds", h, params["tw2t"][l], precision=hp)
              + params["tb2"][l].reshape(1, 1, -1))
        x = x + jnp.swapaxes(t2, 1, 2)
        xn2 = ln(x, params["g2"][l], params["be2"][l])
        h2 = gelu(jnp.einsum("bsd,dc->bsc", xn2, params["cw1"][l], precision=hp)
                  + params["cb1"][l])
        x = x + (jnp.einsum("bsc,cd->bsd", h2, params["cw2"][l], precision=hp)
                 + params["cb2"][l])
    pooled = jnp.mean(x, axis=1)
    return jnp.dot(pooled, params["head_w"], precision=hp) + params["head_b"]


# ----------------------------------- main --------------------------------------
if __name__ == "__main__":
    DIM = 32
    DEPTH = 2
    IMAGE_SIZE = 16
    PATCH_SIZE = 4
    IN_CHANNELS = 3
    NUM_CLASSES = 10
    BATCH = 2

    key = jax.random.PRNGKey(0)
    kx, kp = jax.random.split(key)
    x = jax.random.normal(kx, (BATCH, IN_CHANNELS, IMAGE_SIZE, IMAGE_SIZE), jnp.float32)

    params = init_params(kp, dim=DIM, depth=DEPTH, image_size=IMAGE_SIZE,
                         patch_size=PATCH_SIZE, in_channels=IN_CHANNELS,
                         num_classes=NUM_CLASSES)

    out = mlp_mixer_forward(x, params, patch_size=PATCH_SIZE)
    out = jax.block_until_ready(out)
    assert out.shape == (BATCH, NUM_CLASSES), out.shape

    ref = jax.block_until_ready(mlp_mixer_reference(x, params, patch_size=PATCH_SIZE))
    max_err = float(jnp.max(jnp.abs(out - ref)))
    tol = 1e-3 + 1e-2 * float(jnp.max(jnp.abs(ref)))
    assert max_err < tol, f"mismatch vs reference: max_err={max_err}, tol={tol}"

    print("KERNEL_OK")
</pallas_src>

<mosaic_0001>
module attributes {stable_mosaic.version = 11 : i64} {
  func.func @mixer_fused_kernel(%arg0: i32, %arg1: i32, %arg2: memref<2x16x48xf32, #tpu.memory_space<vmem>>, %arg3: memref<48x32xf32, #tpu.memory_space<vmem>>, %arg4: memref<1x32xf32, #tpu.memory_space<vmem>>, %arg5: memref<1x1x32xf32, #tpu.memory_space<vmem>>, %arg6: memref<1x1x32xf32, #tpu.memory_space<vmem>>, %arg7: memref<1x16x16xf32, #tpu.memory_space<vmem>>, %arg8: memref<1x16x1xf32, #tpu.memory_space<vmem>>, %arg9: memref<1x16x16xf32, #tpu.memory_space<vmem>>, %arg10: memref<1x16x1xf32, #tpu.memory_space<vmem>>, %arg11: memref<1x1x32xf32, #tpu.memory_space<vmem>>, %arg12: memref<1x1x32xf32, #tpu.memory_space<vmem>>, %arg13: memref<1x32x128xf32, #tpu.memory_space<vmem>>, %arg14: memref<1x1x128xf32, #tpu.memory_space<vmem>>, %arg15: memref<1x128x32xf32, #tpu.memory_space<vmem>>, %arg16: memref<1x1x32xf32, #tpu.memory_space<vmem>>, %arg17: memref<32x10xf32, #tpu.memory_space<vmem>>, %arg18: memref<1x10xf32, #tpu.memory_space<vmem>>, %arg19: memref<1x2x10xf32, #tpu.memory_space<vmem>>, %arg20: memref<2x16x32xf32, #tpu.memory_space<vmem>>) attributes {dimension_semantics = [#tpu.dimension_semantics<parallel>, #tpu.dimension_semantics<arbitrary>], iteration_bounds = array<i64: 1, 2>, scalar_prefetch = 0 : i64, scratch_operands = 1 : i64, tpu.core_type = #tpu.core_type<tc>, window_params = [{transform_indices = @transform_0, window_bounds = array<i64: 2, 16, 48>}, {pipeline_mode = #tpu.pipeline_mode<synchronous>, transform_indices = @transform_1, window_bounds = array<i64: 48, 32>}, {pipeline_mode = #tpu.pipeline_mode<synchronous>, transform_indices = @transform_2, window_bounds = array<i64: 1, 32>}, {transform_indices = @transform_3, window_bounds = array<i64: 1, 1, 32>}, {transform_indices = @transform_4, window_bounds = array<i64: 1, 1, 32>}, {transform_indices = @transform_5, window_bounds = array<i64: 1, 16, 16>}, {transform_indices = @transform_6, window_bounds = array<i64: 1, 16, 1>}, {transform_indices = @transform_7, window_bounds = array<i64: 1, 16, 16>}, {transform_indices = @transform_8, window_bounds = array<i64: 1, 16, 1>}, {transform_indices = @transform_9, window_bounds = array<i64: 1, 1, 32>}, {transform_indices = @transform_10, window_bounds = array<i64: 1, 1, 32>}, {transform_indices = @transform_11, window_bounds = array<i64: 1, 32, 128>}, {transform_indices = @transform_12, window_bounds = array<i64: 1, 1, 128>}, {transform_indices = @transform_13, window_bounds = array<i64: 1, 128, 32>}, {transform_indices = @transform_14, window_bounds = array<i64: 1, 1, 32>}, {pipeline_mode = #tpu.pipeline_mode<synchronous>, transform_indices = @transform_15, window_bounds = array<i64: 32, 10>}, {pipeline_mode = #tpu.pipeline_mode<synchronous>, transform_indices = @transform_16, window_bounds = array<i64: 1, 10>}, {transform_indices = @transform_17, window_bounds = array<i64: 1, 2, 10>}]} {
    %c0_i32 = arith.constant 0 : i32
    %0 = arith.cmpi eq, %arg1, %c0_i32 : i32
    %1 = arith.extui %0 : i1 to i32
    %c0_i32_0 = arith.constant 0 : i32
    %2 = arith.cmpi ne, %1, %c0_i32_0 : i32
    scf.if %2 {
      %c0_68 = arith.constant 0 : index
      %c0_69 = arith.constant 0 : index
      %c0_70 = arith.constant 0 : index
      %142 = vector.load %arg2[%c0_68, %c0_69, %c0_70] : memref<2x16x48xf32, #tpu.memory_space<vmem>>, vector<2x16x48xf32>
      %143 = vector.shape_cast %142 : vector<2x16x48xf32> to vector<32x48xf32>
      %c0_71 = arith.constant 0 : index
      %c0_72 = arith.constant 0 : index
      %144 = vector.load %arg3[%c0_71, %c0_72] : memref<48x32xf32, #tpu.memory_space<vmem>>, vector<48x32xf32>
      %cst_73 = arith.constant dense<0.000000e+00> : vector<32x32xf32>
      %145 = tpu.matmul %143, %144, %cst_73 {dimension_numbers = #tpu.dot_dimension_numbers<[1], [0], [0], [1], [0, 0, 1, 1], [], []>} : vector<32x48xf32>, vector<48x32xf32>, vector<32x32xf32> -> vector<32x32xf32>
      %c0_74 = arith.constant 0 : index
      %c0_75 = arith.constant 0 : index
      %146 = vector.load %arg4[%c0_74, %c0_75] : memref<1x32xf32, #tpu.memory_space<vmem>>, vector<1x32xf32>
      %147 = vector.broadcast %146 : vector<1x32xf32> to vector<32x32xf32>
      %148 = arith.addf %145, %147 : vector<32x32xf32>
      %149 = vector.shape_cast %148 : vector<32x32xf32> to vector<2x16x32xf32>
      %c0_76 = arith.constant 0 : index
      %c0_77 = arith.constant 0 : index
      %c0_78 = arith.constant 0 : index
      %150 = vector.load %arg20[%c0_76, %c0_77, %c0_78] : memref<2x16x32xf32, #tpu.memory_space<vmem>>, vector<2x16x32xf32>
      tpu.vector_store %arg20[%c0_76, %c0_77, %c0_78], %149 {strides = array<i32>} : memref<2x16x32xf32, #tpu.memory_space<vmem>>, vector<2x16x32xf32>,
    } else {
    }
    %c0 = arith.constant 0 : index
    %c0_1 = arith.constant 0 : index
    %c0_2 = arith.constant 0 : index
    %3 = vector.load %arg20[%c0, %c0_1, %c0_2] : memref<2x16x32xf32, #tpu.memory_space<vmem>>, vector<2x16x32xf32>
    %c0_3 = arith.constant 0 : index
    %c0_4 = arith.constant 0 : index
    %c0_5 = arith.constant 0 : index
    %4 = vector.load %arg5[%c0_3, %c0_4, %c0_5] : memref<1x1x32xf32, #tpu.memory_space<vmem>>, vector<1x1x32xf32>
    %5 = vector.shape_cast %4 : vector<1x1x32xf32> to vector<1x32xf32>
    %c0_6 = arith.constant 0 : index
    %c0_7 = arith.constant 0 : index
    %c0_8 = arith.constant 0 : index
    %6 = vector.load %arg6[%c0_6, %c0_7, %c0_8] : memref<1x1x32xf32, #tpu.memory_space<vmem>>, vector<1x1x32xf32>
    %7 = vector.shape_cast %6 : vector<1x1x32xf32> to vector<1x32xf32>
    %c0_9 = arith.constant 0 : index
    %c0_10 = arith.constant 0 : index
    %c0_11 = arith.constant 0 : index
    %8 = vector.load %arg11[%c0_9, %c0_10, %c0_11] : memref<1x1x32xf32, #tpu.memory_space<vmem>>, vector<1x1x32xf32>
    %9 = vector.shape_cast %8 : vector<1x1x32xf32> to vector<1x32xf32>
    %c0_12 = arith.constant 0 : index
    %c0_13 = arith.constant 0 : index
    %c0_14 = arith.constant 0 : index
    %10 = vector.load %arg12[%c0_12, %c0_13, %c0_14] : memref<1x1x32xf32, #tpu.memory_space<vmem>>, vector<1x1x32xf32>
    %11 = vector.shape_cast %10 : vector<1x1x32xf32> to vector<1x32xf32>
    %c0_15 = arith.constant 0 : index
    %c0_16 = arith.constant 0 : index
    %c0_17 = arith.constant 0 : index
    %12 = vector.load %arg7[%c0_15, %c0_16, %c0_17] : memref<1x16x16xf32, #tpu.memory_space<vmem>>, vector<1x16x16xf32>
    %13 = vector.shape_cast %12 : vector<1x16x16xf32> to vector<16x16xf32>
    %c0_18 = arith.constant 0 : index
    %c0_19 = arith.constant 0 : index
    %c0_20 = arith.constant 0 : index
    %14 = vector.load %arg9[%c0_18, %c0_19, %c0_20] : memref<1x16x16xf32, #tpu.memory_space<vmem>>, vector<1x16x16xf32>
    %15 = vector.shape_cast %14 : vector<1x16x16xf32> to vector<16x16xf32>
    %c0_21 = arith.constant 0 : index
    %c0_22 = arith.constant 0 : index
    %c0_23 = arith.constant 0 : index
    %16 = vector.load %arg8[%c0_21, %c0_22, %c0_23] : memref<1x16x1xf32, #tpu.memory_space<vmem>>, vector<1x16x1xf32>
    %17 = vector.shape_cast %16 : vector<1x16x1xf32> to vector<16x1xf32>
    %c0_24 = arith.constant 0 : index
    %c0_25 = arith.constant 0 : index
    %c0_26 = arith.constant 0 : index
    %18 = vector.load %arg10[%c0_24, %c0_25, %c0_26] : memref<1x16x1xf32, #tpu.memory_space<vmem>>, vector<1x16x1xf32>
    %19 = vector.shape_cast %18 : vector<1x16x1xf32> to vector<16x1xf32>
    %c0_27 = arith.constant 0 : index
    %c0_28 = arith.constant 0 : index
    %c0_29 = arith.constant 0 : index
    %20 = vector.load %arg13[%c0_27, %c0_28, %c0_29] : memref<1x32x128xf32, #tpu.memory_space<vmem>>, vector<1x32x128xf32>
    %21 = vector.shape_cast %20 : vector<1x32x128xf32> to vector<32x128xf32>
    %c0_30 = arith.constant 0 : index
    %c0_31 = arith.constant 0 : index
    %c0_32 = arith.constant 0 : index
    %22 = vector.load %arg14[%c0_30, %c0_31, %c0_32] : memref<1x1x128xf32, #tpu.memory_space<vmem>>, vector<1x1x128xf32>
    %23 = vector.shape_cast %22 : vector<1x1x128xf32> to vector<1x128xf32>
    %c0_33 = arith.constant 0 : index
    %c0_34 = arith.constant 0 : index
    %c0_35 = arith.constant 0 : index
    %24 = vector.load %arg15[%c0_33, %c0_34, %c0_35] : memref<1x128x32xf32, #tpu.memory_space<vmem>>, vector<1x128x32xf32>
    %25 = vector.shape_cast %24 : vector<1x128x32xf32> to vector<128x32xf32>
    %c0_36 = arith.constant 0 : index
    %c0_37 = arith.constant 0 : index
    %c0_38 = arith.constant 0 : index
    %26 = vector.load %arg16[%c0_36, %c0_37, %c0_38] : memref<1x1x32xf32, #tpu.memory_space<vmem>>, vector<1x1x32xf32>
    %27 = vector.shape_cast %26 : vector<1x1x32xf32> to vector<1x32xf32>
    %28 = vector.shape_cast %3 : vector<2x16x32xf32> to vector<32x32xf32>
    %cst = arith.constant dense<0.000000e+00> : vector<32xf32>
    %29 = vector.multi_reduction <add>, %28, %cst [1] : vector<32x32xf32> to vector<32xf32>
    %30 = vector.shape_cast %29 : vector<32xf32> to vector<32x1xf32>
    %31 = arith.mulf %28, %28 : vector<32x32xf32>
    %cst_39 = arith.constant dense<0.000000e+00> : vector<32xf32>
    %32 = vector.multi_reduction <add>, %31, %cst_39 [1] : vector<32x32xf32> to vector<32xf32>
    %33 = vector.shape_cast %32 : vector<32xf32> to vector<32x1xf32>
    %cst_40 = arith.constant 3.125000e-02 : f32
    %34 = vector.broadcast %cst_40 : f32 to vector<32x1xf32>
    %35 = arith.mulf %30, %34 : vector<32x1xf32>
    %cst_41 = arith.constant 3.125000e-02 : f32
    %36 = vector.broadcast %cst_41 : f32 to vector<32x1xf32>
    %37 = arith.mulf %33, %36 : vector<32x1xf32>
    %38 = arith.mulf %35, %35 : vector<32x1xf32>
    %39 = arith.subf %37, %38 : vector<32x1xf32>
    %cst_42 = arith.constant 0.000000e+00 : f32
    %40 = vector.broadcast %cst_42 : f32 to vector<32x1xf32>
    %41 = arith.maximumf %39, %40 : vector<32x1xf32>
    %42 = vector.broadcast %35 : vector<32x1xf32> to vector<32x32xf32>
    %43 = arith.subf %28, %42 : vector<32x32xf32>
    %cst_43 = arith.constant 9.99999974E-6 : f32
    %44 = vector.broadcast %cst_43 : f32 to vector<32x1xf32>
    %45 = arith.addf %41, %44 : vector<32x1xf32>
    %46 = math.rsqrt %45 : vector<32x1xf32>
    %47 = vector.broadcast %46 : vector<32x1xf32> to vector<32x32xf32>
    %48 = arith.mulf %43, %47 : vector<32x32xf32>
    %49 = vector.broadcast %5 : vector<1x32xf32> to vector<32x32xf32>
    %50 = arith.mulf %48, %49 : vector<32x32xf32>
    %51 = vector.broadcast %7 : vector<1x32xf32> to vector<32x32xf32>
    %52 = arith.addf %50, %51 : vector<32x32xf32>
    %53 = vector.shape_cast %52 : vector<32x32xf32> to vector<2x16x32xf32>
    %54 = vector.shape_cast %17 : vector<16x1xf32> to vector<16x1xf32>
    %55 = vector.broadcast %54 : vector<16x1xf32> to vector<16x32xf32>
    %56 = vector.shape_cast %19 : vector<16x1xf32> to vector<16x1xf32>
    %57 = vector.broadcast %56 : vector<16x1xf32> to vector<16x32xf32>
    %58 = vector.extract_strided_slice %53 {offsets = [0, 0, 0], sizes = [1, 16, 32], strides = [1, 1, 1]} : vector<2x16x32xf32> to vector<1x16x32xf32>
    %59 = vector.shape_cast %58 : vector<1x16x32xf32> to vector<16x32xf32>
    %cst_44 = arith.constant dense<0.000000e+00> : vector<16x32xf32>
    %60 = tpu.matmul %13, %59, %cst_44 {dimension_numbers = #tpu.dot_dimension_numbers<[1], [0], [0], [1], [0, 0, 1, 1], [], []>} : vector<16x16xf32>, vector<16x32xf32>, vector<16x32xf32> -> vector<16x32xf32>
    %61 = arith.addf %60, %55 : vector<16x32xf32>
    %cst_45 = arith.constant 5.000000e-01 : f32
    %62 = vector.broadcast %cst_45 : f32 to vector<16x32xf32>
    %63 = arith.mulf %62, %61 : vector<16x32xf32>
    %cst_46 = arith.constant 0.707106769 : f32
    %64 = vector.broadcast %cst_46 : f32 to vector<16x32xf32>
    %65 = arith.mulf %61, %64 : vector<16x32xf32>
    %66 = math.erf %65 : vector<16x32xf32>
    %cst_47 = arith.constant 1.000000e+00 : f32
    %67 = vector.broadcast %cst_47 : f32 to vector<16x32xf32>
    %68 = arith.addf %67, %66 : vector<16x32xf32>
    %69 = arith.mulf %63, %68 : vector<16x32xf32>
    %cst_48 = arith.constant dense<0.000000e+00> : vector<16x32xf32>
    %70 = tpu.matmul %15, %69, %cst_48 {dimension_numbers = #tpu.dot_dimension_numbers<[1], [0], [0], [1], [0, 0, 1, 1], [], []>} : vector<16x16xf32>, vector<16x32xf32>, vector<16x32xf32> -> vector<16x32xf32>
    %71 = arith.addf %70, %57 : vector<16x32xf32>
    %72 = vector.extract_strided_slice %3 {offsets = [0, 0, 0], sizes = [1, 16, 32], strides = [1, 1, 1]} : vector<2x16x32xf32> to vector<1x16x32xf32>
    %73 = vector.shape_cast %72 : vector<1x16x32xf32> to vector<16x32xf32>
    %74 = arith.addf %73, %71 : vector<16x32xf32>
    %75 = vector.extract_strided_slice %53 {offsets = [1, 0, 0], sizes = [1, 16, 32], strides = [1, 1, 1]} : vector<2x16x32xf32> to vector<1x16x32xf32>
    %76 = vector.shape_cast %75 : vector<1x16x32xf32> to vector<16x32xf32>
    %cst_49 = arith.constant dense<0.000000e+00> : vector<16x32xf32>
    %77 = tpu.matmul %13, %76, %cst_49 {dimension_numbers = #tpu.dot_dimension_numbers<[1], [0], [0], [1], [0, 0, 1, 1], [], []>} : vector<16x16xf32>, vector<16x32xf32>, vector<16x32xf32> -> vector<16x32xf32>
    %78 = arith.addf %77, %55 : vector<16x32xf32>
    %cst_50 = arith.constant 5.000000e-01 : f32
    %79 = vector.broadcast %cst_50 : f32 to vector<16x32xf32>
    %80 = arith.mulf %79, %78 : vector<16x32xf32>
    %cst_51 = arith.constant 0.707106769 : f32
    %81 = vector.broadcast %cst_51 : f32 to vector<16x32xf32>
    %82 = arith.mulf %78, %81 : vector<16x32xf32>
    %83 = math.erf %82 : vector<16x32xf32>
    %cst_52 = arith.constant 1.000000e+00 : f32
    %84 = vector.broadcast %cst_52 : f32 to vector<16x32xf32>
    %85 = arith.addf %84, %83 : vector<16x32xf32>
    %86 = arith.mulf %80, %85 : vector<16x32xf32>
    %cst_53 = arith.constant dense<0.000000e+00> : vector<16x32xf32>
    %87 = tpu.matmul %15, %86, %cst_53 {dimension_numbers = #tpu.dot_dimension_numbers<[1], [0], [0], [1], [0, 0, 1, 1], [], []>} : vector<16x16xf32>, vector<16x32xf32>, vector<16x32xf32> -> vector<16x32xf32>
    %88 = arith.addf %87, %57 : vector<16x32xf32>
    %89 = vector.extract_strided_slice %3 {offsets = [1, 0, 0], sizes = [1, 16, 32], strides = [1, 1, 1]} : vector<2x16x32xf32> to vector<1x16x32xf32>
    %90 = vector.shape_cast %89 : vector<1x16x32xf32> to vector<16x32xf32>
    %91 = arith.addf %90, %88 : vector<16x32xf32>
    %92 = vector.shape_cast %74 : vector<16x32xf32> to vector<1x16x32xf32>
    %93 = vector.shape_cast %91 : vector<16x32xf32> to vector<1x16x32xf32>
    %94 = tpu.concatenate %92, %93 in 0 : vector<1x16x32xf32>, vector<1x16x32xf32> -> vector<2x16x32xf32>
    %95 = vector.shape_cast %94 : vector<2x16x32xf32> to vector<32x32xf32>
    %cst_54 = arith.constant dense<0.000000e+00> : vector<32xf32>
    %96 = vector.multi_reduction <add>, %95, %cst_54 [1] : vector<32x32xf32> to vector<32xf32>
    %97 = vector.shape_cast %96 : vector<32xf32> to vector<32x1xf32>
    %98 = arith.mulf %95, %95 : vector<32x32xf32>
    %cst_55 = arith.constant dense<0.000000e+00> : vector<32xf32>
    %99 = vector.multi_reduction <add>, %98, %cst_55 [1] : vector<32x32xf32> to vector<32xf32>
    %100 = vector.shape_cast %99 : vector<32xf32> to vector<32x1xf32>
    %cst_56 = arith.constant 3.125000e-02 : f32
    %101 = vector.broadcast %cst_56 : f32 to vector<32x1xf32>
    %102 = arith.mulf %97, %101 : vector<32x1xf32>
    %cst_57 = arith.constant 3.125000e-02 : f32
    %103 = vector.broadcast %cst_57 : f32 to vector<32x1xf32>
    %104 = arith.mulf %100, %103 : vector<32x1xf32>
    %105 = arith.mulf %102, %102 : vector<32x1xf32>
    %106 = arith.subf %104, %105 : vector<32x1xf32>
    %cst_58 = arith.constant 0.000000e+00 : f32
    %107 = vector.broadcast %cst_58 : f32 to vector<32x1xf32>
    %108 = arith.maximumf %106, %107 : vector<32x1xf32>
    %109 = vector.broadcast %102 : vector<32x1xf32> to vector<32x32xf32>
    %110 = arith.subf %95, %109 : vector<32x32xf32>
    %cst_59 = arith.constant 9.99999974E-6 : f32
    %111 = vector.broadcast %cst_59 : f32 to vector<32x1xf32>
    %112 = arith.addf %108, %111 : vector<32x1xf32>
    %113 = math.rsqrt %112 : vector<32x1xf32>
    %114 = vector.broadcast %113 : vector<32x1xf32> to vector<32x32xf32>
    %115 = arith.mulf %110, %114 : vector<32x32xf32>
    %116 = vector.broadcast %9 : vector<1x32xf32> to vector<32x32xf32>
    %117 = arith.mulf %115, %116 : vector<32x32xf32>
    %118 = vector.broadcast %11 : vector<1x32xf32> to vector<32x32xf32>
    %119 = arith.addf %117, %118 : vector<32x32xf32>
    %cst_60 = arith.constant dense<0.000000e+00> : vector<32x128xf32>
    %120 = tpu.matmul %119, %21, %cst_60 {dimension_numbers = #tpu.dot_dimension_numbers<[1], [0], [0], [1], [0, 0, 1, 1], [], []>} : vector<32x32xf32>, vector<32x128xf32>, vector<32x128xf32> -> vector<32x128xf32>
    %121 = vector.broadcast %23 : vector<1x128xf32> to vector<32x128xf32>
    %122 = arith.addf %120, %121 : vector<32x128xf32>
    %cst_61 = arith.constant 5.000000e-01 : f32
    %123 = vector.broadcast %cst_61 : f32 to vector<32x128xf32>
    %124 = arith.mulf %123, %122 : vector<32x128xf32>
    %cst_62 = arith.constant 0.707106769 : f32
    %125 = vector.broadcast %cst_62 : f32 to vector<32x128xf32>
    %126 = arith.mulf %122, %125 : vector<32x128xf32>
    %127 = math.erf %126 : vector<32x128xf32>
    %cst_63 = arith.constant 1.000000e+00 : f32
    %128 = vector.broadcast %cst_63 : f32 to vector<32x128xf32>
    %129 = arith.addf %128, %127 : vector<32x128xf32>
    %130 = arith.mulf %124, %129 : vector<32x128xf32>
    %cst_64 = arith.constant dense<0.000000e+00> : vector<32x32xf32>
    %131 = tpu.matmul %130, %25, %cst_64 {dimension_numbers = #tpu.dot_dimension_numbers<[1], [0], [0], [1], [0, 0, 1, 1], [], []>} : vector<32x128xf32>, vector<128x32xf32>, vector<32x32xf32> -> vector<32x32xf32>
    %132 = vector.broadcast %27 : vector<1x32xf32> to vector<32x32xf32>
    %133 = arith.addf %131, %132 : vector<32x32xf32>
    %134 = arith.addf %95, %133 : vector<32x32xf32>
    %135 = vector.shape_cast %134 : vector<32x32xf32> to vector<2x16x32xf32>
    %c1_i32 = arith.constant 1 : i32
    %136 = arith.cmpi slt, %arg1, %c1_i32 : i32
    %137 = arith.extui %136 : i1 to i32
    %c0_i32_65 = arith.constant 0 : i32
    %138 = arith.cmpi ne, %137, %c0_i32_65 : i32
    scf.if %138 {
      %c0_68 = arith.constant 0 : index
      %c0_69 = arith.constant 0 : index
      %c0_70 = arith.constant 0 : index
      %142 = vector.load %arg20[%c0_68, %c0_69, %c0_70] : memref<2x16x32xf32, #tpu.memory_space<vmem>>, vector<2x16x32xf32>
      tpu.vector_store %arg20[%c0_68, %c0_69, %c0_70], %135 {strides = array<i32>} : memref<2x16x32xf32, #tpu.memory_space<vmem>>, vector<2x16x32xf32>,
    } else {
    }
    %c1_i32_66 = arith.constant 1 : i32
    %139 = arith.cmpi eq, %arg1, %c1_i32_66 : i32
    %140 = arith.extui %139 : i1 to i32
    %c0_i32_67 = arith.constant 0 : i32
    %141 = arith.cmpi ne, %140, %c0_i32_67 : i32
    scf.if %141 {
      %cst_68 = arith.constant dense<0.000000e+00> : vector<2x32xf32>
      %142 = vector.multi_reduction <add>, %135, %cst_68 [1] : vector<2x16x32xf32> to vector<2x32xf32>
      %cst_69 = arith.constant 1.600000e+01 : f32
      %143 = vector.broadcast %cst_69 : f32 to vector<2x32xf32>
      %144 = arith.divf %142, %143 : vector<2x32xf32>
      %c0_70 = arith.constant 0 : index
      %c0_71 = arith.constant 0 : index
      %145 = vector.load %arg17[%c0_70, %c0_71] : memref<32x10xf32, #tpu.memory_space<vmem>>, vector<32x10xf32>
      %cst_72 = arith.constant dense<0.000000e+00> : vector<2x10xf32>
      %146 = tpu.matmul %144, %145, %cst_72 {dimension_numbers = #tpu.dot_dimension_numbers<[1], [0], [0], [1], [0, 0, 1, 1], [], []>} : vector<2x32xf32>, vector<32x10xf32>, vector<2x10xf32> -> vector<2x10xf32>
      %c0_73 = arith.constant 0 : index
      %c0_74 = arith.constant 0 : index
      %147 = vector.load %arg18[%c0_73, %c0_74] : memref<1x10xf32, #tpu.memory_space<vmem>>, vector<1x10xf32>
      %148 = vector.broadcast %147 : vector<1x10xf32> to vector<2x10xf32>
      %149 = arith.addf %146, %148 : vector<2x10xf32>
      %c0_75 = arith.constant 0 : index
      %c0_76 = arith.constant 0 : index
      %c0_77 = arith.constant 0 : index
      %150 = vector.load %arg19[%c0_75, %c0_76, %c0_77] : memref<1x2x10xf32, #tpu.memory_space<vmem>>, vector<1x2x10xf32>
      %151 = vector.shape_cast %150 : vector<1x2x10xf32> to vector<2x10xf32>
      %152 = vector.shape_cast %149 : vector<2x10xf32> to vector<1x2x10xf32>
      tpu.vector_store %arg19[%c0_75, %c0_76, %c0_77], %152 {strides = array<i32>} : memref<1x2x10xf32, #tpu.memory_space<vmem>>, vector<1x2x10xf32>,
    } else {
    }
    return
  }
  func.func @transform_0(%arg0: i32, %arg1: i32) -> (i32, i32, i32) {
    %c0_i32 = arith.constant 0 : i32
    %c0_i32_0 = arith.constant 0 : i32
    %c0_i32_1 = arith.constant 0 : i32
    return %arg0, %c0_i32, %c0_i32_0 : i32, i32, i32
  }
  func.func @transform_1(%arg0: i32, %arg1: i32) -> (i32, i32) {
    %c0_i32 = arith.constant 0 : i32
    %c0_i32_0 = arith.constant 0 : i32
    %c0_i32_1 = arith.constant 0 : i32
    return %c0_i32, %c0_i32_0 : i32, i32
  }
  func.func @transform_2(%arg0: i32, %arg1: i32) -> (i32, i32) {
    %c0_i32 = arith.constant 0 : i32
    %c0_i32_0 = arith.constant 0 : i32
    %c0_i32_1 = arith.constant 0 : i32
    return %c0_i32, %c0_i32_0 : i32, i32
  }
  func.func @transform_3(%arg0: i32, %arg1: i32) -> (i32, i32, i32) {
    %c0_i32 = arith.constant 0 : i32
    %c0_i32_0 = arith.constant 0 : i32
    %c0_i32_1 = arith.constant 0 : i32
    return %arg1, %c0_i32, %c0_i32_0 : i32, i32, i32
  }
  func.func @transform_4(%arg0: i32, %arg1: i32) -> (i32, i32, i32) {
    %c0_i32 = arith.constant 0 : i32
    %c0_i32_0 = arith.constant 0 : i32
    %c0_i32_1 = arith.constant 0 : i32
    return %arg1, %c0_i32, %c0_i32_0 : i32, i32, i32
  }
  func.func @transform_5(%arg0: i32, %arg1: i32) -> (i32, i32, i32) {
    %c0_i32 = arith.constant 0 : i32
    %c0_i32_0 = arith.constant 0 : i32
    %c0_i32_1 = arith.constant 0 : i32
    return %arg1, %c0_i32, %c0_i32_0 : i32, i32, i32
  }
  func.func @transform_6(%arg0: i32, %arg1: i32) -> (i32, i32, i32) {
    %c0_i32 = arith.constant 0 : i32
    %c0_i32_0 = arith.constant 0 : i32
    %c0_i32_1 = arith.constant 0 : i32
    return %arg1, %c0_i32, %c0_i32_0 : i32, i32, i32
  }
  func.func @transform_7(%arg0: i32, %arg1: i32) -> (i32, i32, i32) {
    %c0_i32 = arith.constant 0 : i32
    %c0_i32_0 = arith.constant 0 : i32
    %c0_i32_1 = arith.constant 0 : i32
    return %arg1, %c0_i32, %c0_i32_0 : i32, i32, i32
  }
  func.func @transform_8(%arg0: i32, %arg1: i32) -> (i32, i32, i32) {
    %c0_i32 = arith.constant 0 : i32
    %c0_i32_0 = arith.constant 0 : i32
    %c0_i32_1 = arith.constant 0 : i32
    return %arg1, %c0_i32, %c0_i32_0 : i32, i32, i32
  }
  func.func @transform_9(%arg0: i32, %arg1: i32) -> (i32, i32, i32) {
    %c0_i32 = arith.constant 0 : i32
    %c0_i32_0 = arith.constant 0 : i32
    %c0_i32_1 = arith.constant 0 : i32
    return %arg1, %c0_i32, %c0_i32_0 : i32, i32, i32
  }
  func.func @transform_10(%arg0: i32, %arg1: i32) -> (i32, i32, i32) {
    %c0_i32 = arith.constant 0 : i32
    %c0_i32_0 = arith.constant 0 : i32
    %c0_i32_1 = arith.constant 0 : i32
    return %arg1, %c0_i32, %c0_i32_0 : i32, i32, i32
  }
  func.func @transform_11(%arg0: i32, %arg1: i32) -> (i32, i32, i32) {
    %c0_i32 = arith.constant 0 : i32
    %c0_i32_0 = arith.constant 0 : i32
    %c0_i32_1 = arith.constant 0 : i32
    return %arg1, %c0_i32, %c0_i32_0 : i32, i32, i32
  }
  func.func @transform_12(%arg0: i32, %arg1: i32) -> (i32, i32, i32) {
    %c0_i32 = arith.constant 0 : i32
    %c0_i32_0 = arith.constant 0 : i32
    %c0_i32_1 = arith.constant 0 : i32
    return %arg1, %c0_i32, %c0_i32_0 : i32, i32, i32
  }
  func.func @transform_13(%arg0: i32, %arg1: i32) -> (i32, i32, i32) {
    %c0_i32 = arith.constant 0 : i32
    %c0_i32_0 = arith.constant 0 : i32
    %c0_i32_1 = arith.constant 0 : i32
    return %arg1, %c0_i32, %c0_i32_0 : i32, i32, i32
  }
  func.func @transform_14(%arg0: i32, %arg1: i32) -> (i32, i32, i32) {
    %c0_i32 = arith.constant 0 : i32
    %c0_i32_0 = arith.constant 0 : i32
    %c0_i32_1 = arith.constant 0 : i32
    return %arg1, %c0_i32, %c0_i32_0 : i32, i32, i32
  }
  func.func @transform_15(%arg0: i32, %arg1: i32) -> (i32, i32) {
    %c0_i32 = arith.constant 0 : i32
    %c0_i32_0 = arith.constant 0 : i32
    %c0_i32_1 = arith.constant 0 : i32
    return %c0_i32, %c0_i32_0 : i32, i32
  }
  func.func @transform_16(%arg0: i32, %arg1: i32) -> (i32, i32) {
    %c0_i32 = arith.constant 0 : i32
    %c0_i32_0 = arith.constant 0 : i32
    %c0_i32_1 = arith.constant 0 : i32
    return %c0_i32, %c0_i32_0 : i32, i32
  }
  func.func @transform_17(%arg0: i32, %arg1: i32) -> (i32, i32, i32) {
    %c0_i32 = arith.constant 0 : i32
    %c0_i32_0 = arith.constant 0 : i32
    %c0_i32_1 = arith.constant 0 : i32
    return %arg0, %c0_i32, %c0_i32_0 : i32, i32, i32
  }
}

</mosaic_0001>

<llo_original>
// kernel: tpu_custom_call.1
$region0: #{tpu_custom_call.1}
  #allocation0 [shape = 'u32[]', space=smem, size = 0x4, offset = 0x4, fixed_abs, tag = 'smem constant byte address 0x4 - core index']
  #allocation1 [shape = 'u32[144,128]{1,0:T(1,128)}', space=vmem, size = 0x12000, scoped, tag = 'internal scratch']
  #allocation2 [shape = 'f32[2,16,32]{2,1,0:T(8,128)}', space=vmem, size = 0x4000, scoped, tag = 'scratch operand']
  %s0 = inlined_call_operand.vmem [shape: f32[2,16,48], index: 0, kind: input, shape index: {}]
  %s1 = inlined_call_operand.vmem [shape: f32[48,32], index: 1, kind: input, shape index: {}]
  %s2 = inlined_call_operand.vmem [shape: f32[1,32], index: 2, kind: input, shape index: {}]
  %s3 = inlined_call_operand.vmem [shape: f32[2,1,32], index: 3, kind: input, shape index: {}]
  %s4 = inlined_call_operand.vmem [shape: f32[2,1,32], index: 4, kind: input, shape index: {}]
  %s5 = inlined_call_operand.vmem [shape: f32[2,16,16], index: 5, kind: input, shape index: {}]
  %s6 = inlined_call_operand.vmem [shape: f32[2,16,1], index: 6, kind: input, shape index: {}]
  %s7 = inlined_call_operand.vmem [shape: f32[2,16,16], index: 7, kind: input, shape index: {}]
  %s8 = inlined_call_operand.vmem [shape: f32[2,16,1], index: 8, kind: input, shape index: {}]
  %s9 = inlined_call_operand.vmem [shape: f32[2,1,32], index: 9, kind: input, shape index: {}]
  %s10 = inlined_call_operand.vmem [shape: f32[2,1,32], index: 10, kind: input, shape index: {}]
  %s11 = inlined_call_operand.vmem [shape: f32[2,32,128], index: 11, kind: input, shape index: {}]
  %s12 = inlined_call_operand.vmem [shape: f32[2,1,128], index: 12, kind: input, shape index: {}]
  %s13 = inlined_call_operand.vmem [shape: f32[2,128,32], index: 13, kind: input, shape index: {}]
  %s14 = inlined_call_operand.vmem [shape: f32[2,1,32], index: 14, kind: input, shape index: {}]
  %s15 = inlined_call_operand.vmem [shape: f32[32,10], index: 15, kind: input, shape index: {}]
  %s16 = inlined_call_operand.vmem [shape: f32[1,10], index: 16, kind: input, shape index: {}]
  %s17 = inlined_call_operand.hbm [shape: f32[1,2,10], index: 17, kind: output, shape index: {}]
  %s18 = sld [smem:[#allocation0]]
  $region113: #{tpu_custom_call.1} parent=0
    _
  %s20 = ssub.s32 1, %s18
  %s21 = scalar_select 0, %s20, %s18
  $region1: #{tpu_custom_call.1} parent=0
    #allocation3 [shape = 'u8[1024]{0}', space=vmem, size = 0x400, scoped, tag = 'output window, operand 0, single buffered']
    #allocation4 [shape = 's32[2]{0}', space=sflag, size = 0x8, scoped, tag = 'scoped memory for tpu_custom_call.1']
    %22 = vsyncpa [#allocation4], 0
    loop: start=0, step=1, limit=4
    $region2: #{tpu_custom_call.1} parent=1 // loop_pre_header
      _
    $region3: #{tpu_custom_call.1} parent=1 // loop_header
      %s24 = sphi 0, %s28
      %p25 = scmp.ge.s32.totalorder %s24, 4
      %s31 = sphi 0, %s43
      %s32 = sphi 0, %s39
      %s33 = sphi 0, %s31
      %s34 = sphi 0, %s32
      %s35 = sphi 0, %s33
      %s36 = sphi 0, %s34
      %s46 = sphi 0, %s48
      %s49 = sphi 0, %s46
      %s50 = sphi 0, %s49
      %s66 = sphi 0, %s50
      %s70 = sphi 0, %s70
      %s72 = sphi 0, %s70
      %s73 = sphi 0, %s72
      %s87 = sphi 0, %s73
      %s91 = sphi 0, %s91
      %s93 = sphi 0, %s91
      %s94 = sphi 0, %s93
      %s108 = sphi 0, %s94
      %s114 = sphi 0, %s116
      %s117 = sphi 0, %s114
      %s118 = sphi 0, %s117
      %s134 = sphi 0, %s118
      %s140 = sphi 0, %s142
      %s143 = sphi 0, %s140
      %s144 = sphi 0, %s143
      %s160 = sphi 0, %s144
      %s166 = sphi 0, %s168
      %s169 = sphi 0, %s166
      %s170 = sphi 0, %s169
      %s186 = sphi 0, %s170
      %s192 = sphi 0, %s194
      %s195 = sphi 0, %s192
      %s196 = sphi 0, %s195
      %s212 = sphi 0, %s196
      %s218 = sphi 0, %s220
      %s221 = sphi 0, %s218
      %s222 = sphi 0, %s221
      %s238 = sphi 0, %s222
      %s244 = sphi 0, %s246
      %s247 = sphi 0, %s244
      %s248 = sphi 0, %s247
      %s264 = sphi 0, %s248
      %s270 = sphi 0, %s272
      %s273 = sphi 0, %s270
      %s274 = sphi 0, %s273
      %s290 = sphi 0, %s274
      %s296 = sphi 0, %s298
      %s299 = sphi 0, %s296
      %s300 = sphi 0, %s299
      %s316 = sphi 0, %s300
      %s322 = sphi 0, %s324
      %s325 = sphi 0, %s322
      %s326 = sphi 0, %s325
      %s342 = sphi 0, %s326
      %s348 = sphi 0, %s350
      %s351 = sphi 0, %s348
      %s352 = sphi 0, %s351
      %s368 = sphi 0, %s352
      %s374 = sphi 0, %s376
      %s377 = sphi 0, %s374
      %s378 = sphi 0, %s377
      %s394 = sphi 0, %s378
      %s400 = sphi 0, %s402
      %s403 = sphi 0, %s400
      %s404 = sphi 0, %s403
      %s420 = sphi 0, %s404
      %s424 = sphi 0, %s424
      %s426 = sphi 0, %s424
      %s427 = sphi 0, %s426
      %s441 = sphi 0, %s427
      %s445 = sphi 0, %s445
      %s447 = sphi 0, %s445
      %s448 = sphi 0, %s447
      %s462 = sphi 0, %s448
      %s468 = sphi 0, %s470
      %s471 = sphi 0, %s468
      %s472 = sphi 0, %s471
      %s488 = sphi 0, %s472
    $region4: #{tpu_custom_call.1} parent=1 // loop_header_branch
      %27 = sbr.rel (%p25) target = $region8
    $region5: #{tpu_custom_call.1} parent=1 // loop_body
      %s29 = ssub.s32 %s24, 1
      %s30 = ssub.s32 %s24, 2
      %s37 = sadd.s32 1, %s32
      %p38 = scmp.ge.s32.totalorder %s37, 2
      %s39 = scalar_select %p38, 0, %s37
      %s40 = sadd.s32 1, %s31
      %s41 = scalar_select %p38, %s40, %s31
      %p42 = scmp.ge.s32.totalorder %s41, 1
      %s43 = scalar_select %p42, 0, %s41
      %s44 = ssub.s32 %s31, %s43
      %p45 = scmp.eq.s32.totalorder %s44, 0
      %s47 = sadd.s32 %s46, 1
      %s48 = scalar_select %p45, %s46, %s47
      %p51 = pneg %p45
      %p52 = scmp.eq.s32.totalorder %s24, 1
      %p53 = por %p51, %p52
      %p54 = scmp.ne.s32.totalorder %s46, %s49
      %p55 = scmp.eq.s32.totalorder %s24, 0
      %p56 = por %p54, %p55
      %p57 = scmp.ne.s32.totalorder %s46, %s49
      %p58 = scmp.eq.s32.totalorder %s29, 1
      %p59 = por %p57, %p58
      %p60 = scmp.ne.s32.totalorder %s49, %s50
      %p61 = scmp.eq.s32.totalorder %s29, 0
      %p62 = por %p60, %p61
      %p63 = scmp.ne.s32.totalorder %s49, %s50
      %p64 = scmp.eq.s32.totalorder %s30, 1
      %p65 = por %p63, %p64
      %p67 = scmp.ne.s32.totalorder %s50, %s66
      %p68 = scmp.eq.s32.totalorder %s30, 0
      %p69 = por %p67, %p68
      %s71 = sadd.s32 %s70, 1
      %p74 = scmp.eq.s32.totalorder %s24, 1
      %p75 = scmp.ne.s32.totalorder %s70, %s72
      %p76 = scmp.eq.s32.totalorder %s24, 0
      %p77 = por %p75, %p76
      %p78 = scmp.ne.s32.totalorder %s70, %s72
      %p79 = scmp.eq.s32.totalorder %s29, 1
      %p80 = por %p78, %p79
      %p81 = scmp.ne.s32.totalorder %s72, %s73
      %p82 = scmp.eq.s32.totalorder %s29, 0
      %p83 = por %p81, %p82
      %p84 = scmp.ne.s32.totalorder %s72, %s73
      %p85 = scmp.eq.s32.totalorder %s30, 1
      %p86 = por %p84, %p85
      %p88 = scmp.ne.s32.totalorder %s73, %s87
      %p89 = scmp.eq.s32.totalorder %s30, 0
      %p90 = por %p88, %p89
      %s92 = sadd.s32 %s91, 1
      %p95 = scmp.eq.s32.totalorder %s24, 1
      %p96 = scmp.ne.s32.totalorder %s91, %s93
      %p97 = scmp.eq.s32.totalorder %s24, 0
      %p98 = por %p96, %p97
      %p99 = scmp.ne.s32.totalorder %s91, %s93
      %p100 = scmp.eq.s32.totalorder %s29, 1
      %p101 = por %p99, %p100
      %p102 = scmp.ne.s32.totalorder %s93, %s94
      %p103 = scmp.eq.s32.totalorder %s29, 0
      %p104 = por %p102, %p103
      %p105 = scmp.ne.s32.totalorder %s93, %s94
      %p106 = scmp.eq.s32.totalorder %s30, 1
      %p107 = por %p105, %p106
      %p109 = scmp.ne.s32.totalorder %s94, %s108
      %p110 = scmp.eq.s32.totalorder %s30, 0
      %p111 = por %p109, %p110
      %s112 = ssub.s32 %s32, %s39
      %p113 = scmp.eq.s32.totalorder %s112, 0
      %s115 = sadd.s32 %s114, 1
      %s116 = scalar_select %p113, %s114, %s115
      %p119 = pneg %p113
      %p120 = scmp.eq.s32.totalorder %s24, 1
      %p121 = por %p119, %p120
      %p122 = scmp.ne.s32.totalorder %s114, %s117
      %p123 = scmp.eq.s32.totalorder %s24, 0
      %p124 = por %p122, %p123
      %p125 = scmp.ne.s32.totalorder %s114, %s117
      %p126 = scmp.eq.s32.totalorder %s29, 1
      %p127 = por %p125, %p126
      %p128 = scmp.ne.s32.totalorder %s117, %s118
      %p129 = scmp.eq.s32.totalorder %s29, 0
      %p130 = por %p128, %p129
      %p131 = scmp.ne.s32.totalorder %s117, %s118
      %p132 = scmp.eq.s32.totalorder %s30, 1
      %p133 = por %p131, %p132
      %p135 = scmp.ne.s32.totalorder %s118, %s134
      %p136 = scmp.eq.s32.totalorder %s30, 0
      %p137 = por %p135, %p136
      %s138 = ssub.s32 %s32, %s39
      %p139 = scmp.eq.s32.totalorder %s138, 0
      %s141 = sadd.s32 %s140, 1
      %s142 = scalar_select %p139, %s140, %s141
      %p145 = pneg %p139
      %p146 = scmp.eq.s32.totalorder %s24, 1
      %p147 = por %p145, %p146
      %p148 = scmp.ne.s32.totalorder %s140, %s143
      %p149 = scmp.eq.s32.totalorder %s24, 0
      %p150 = por %p148, %p149
      %p151 = scmp.ne.s32.totalorder %s140, %s143
      %p152 = scmp.eq.s32.totalorder %s29, 1
      %p153 = por %p151, %p152
      %p154 = scmp.ne.s32.totalorder %s143, %s144
      %p155 = scmp.eq.s32.totalorder %s29, 0
      %p156 = por %p154, %p155
      %p157 = scmp.ne.s32.totalorder %s143, %s144
      %p158 = scmp.eq.s32.totalorder %s30, 1
      %p159 = por %p157, %p158
      %p161 = scmp.ne.s32.totalorder %s144, %s160
      %p162 = scmp.eq.s32.totalorder %s30, 0
      %p163 = por %p161, %p162
      %s164 = ssub.s32 %s32, %s39
      %p165 = scmp.eq.s32.totalorder %s164, 0
      %s167 = sadd.s32 %s166, 1
      %s168 = scalar_select %p165, %s166, %s167
      %p171 = pneg %p165
      %p172 = scmp.eq.s32.totalorder %s24, 1
      %p173 = por %p171, %p172
      %p174 = scmp.ne.s32.totalorder %s166, %s169
      %p175 = scmp.eq.s32.totalorder %s24, 0
      %p176 = por %p174, %p175
      %p177 = scmp.ne.s32.totalorder %s166, %s169
      %p178 = scmp.eq.s32.totalorder %s29, 1
      %p179 = por %p177, %p178
      %p180 = scmp.ne.s32.totalorder %s169, %s170
      %p181 = scmp.eq.s32.totalorder %s29, 0
      %p182 = por %p180, %p181
      %p183 = scmp.ne.s32.totalorder %s169, %s170
      %p184 = scmp.eq.s32.totalorder %s30, 1
      %p185 = por %p183, %p184
      %p187 = scmp.ne.s32.totalorder %s170, %s186
      %p188 = scmp.eq.s32.totalorder %s30, 0
      %p189 = por %p187, %p188
      %s190 = ssub.s32 %s32, %s39
      %p191 = scmp.eq.s32.totalorder %s190, 0
      %s193 = sadd.s32 %s192, 1
      %s194 = scalar_select %p191, %s192, %s193
      %p197 = pneg %p191
      %p198 = scmp.eq.s32.totalorder %s24, 1
      %p199 = por %p197, %p198
      %p200 = scmp.ne.s32.totalorder %s192, %s195
      %p201 = scmp.eq.s32.totalorder %s24, 0
      %p202 = por %p200, %p201
      %p203 = scmp.ne.s32.totalorder %s192, %s195
      %p204 = scmp.eq.s32.totalorder %s29, 1
      %p205 = por %p203, %p204
      %p206 = scmp.ne.s32.totalorder %s195, %s196
      %p207 = scmp.eq.s32.totalorder %s29, 0
      %p208 = por %p206, %p207
      %p209 = scmp.ne.s32.totalorder %s195, %s196
      %p210 = scmp.eq.s32.totalorder %s30, 1
      %p211 = por %p209, %p210
      %p213 = scmp.ne.s32.totalorder %s196, %s212
      %p214 = scmp.eq.s32.totalorder %s30, 0
      %p215 = por %p213, %p214
      %s216 = ssub.s32 %s32, %s39
      %p217 = scmp.eq.s32.totalorder %s216, 0
      %s219 = sadd.s32 %s218, 1
      %s220 = scalar_select %p217, %s218, %s219
      %p223 = pneg %p217
      %p224 = scmp.eq.s32.totalorder %s24, 1
      %p225 = por %p223, %p224
      %p226 = scmp.ne.s32.totalorder %s218, %s221
      %p227 = scmp.eq.s32.totalorder %s24, 0
      %p228 = por %p226, %p227
      %p229 = scmp.ne.s32.totalorder %s218, %s221
      %p230 = scmp.eq.s32.totalorder %s29, 1
      %p231 = por %p229, %p230
      %p232 = scmp.ne.s32.totalorder %s221, %s222
      %p233 = scmp.eq.s32.totalorder %s29, 0
      %p234 = por %p232, %p233
      %p235 = scmp.ne.s32.totalorder %s221, %s222
      %p236 = scmp.eq.s32.totalorder %s30, 1
      %p237 = por %p235, %p236
      %p239 = scmp.ne.s32.totalorder %s222, %s238
      %p240 = scmp.eq.s32.totalorder %s30, 0
      %p241 = por %p239, %p240
      %s242 = ssub.s32 %s32, %s39
      %p243 = scmp.eq.s32.totalorder %s242, 0
      %s245 = sadd.s32 %s244, 1
      %s246 = scalar_select %p243, %s244, %s245
      %p249 = pneg %p243
      %p250 = scmp.eq.s32.totalorder %s24, 1
      %p251 = por %p249, %p250
      %p252 = scmp.ne.s32.totalorder %s244, %s247
      %p253 = scmp.eq.s32.totalorder %s24, 0
      %p254 = por %p252, %p253
      %p255 = scmp.ne.s32.totalorder %s244, %s247
      %p256 = scmp.eq.s32.totalorder %s29, 1
      %p257 = por %p255, %p256
      %p258 = scmp.ne.s32.totalorder %s247, %s248
      %p259 = scmp.eq.s32.totalorder %s29, 0
      %p260 = por %p258, %p259
      %p261 = scmp.ne.s32.totalorder %s247, %s248
      %p262 = scmp.eq.s32.totalorder %s30, 1
      %p263 = por %p261, %p262
      %p265 = scmp.ne.s32.totalorder %s248, %s264
      %p266 = scmp.eq.s32.totalorder %s30, 0
      %p267 = por %p265, %p266
      %s268 = ssub.s32 %s32, %s39
      %p269 = scmp.eq.s32.totalorder %s268, 0
      %s271 = sadd.s32 %s270, 1
      %s272 = scalar_select %p269, %s270, %s271
      %p275 = pneg %p269
      %p276 = scmp.eq.s32.totalorder %s24, 1
      %p277 = por %p275, %p276
      %p278 = scmp.ne.s32.totalorder %s270, %s273
      %p279 = scmp.eq.s32.totalorder %s24, 0
      %p280 = por %p278, %p279
      %p281 = scmp.ne.s32.totalorder %s270, %s273
      %p282 = scmp.eq.s32.totalorder %s29, 1
      %p283 = por %p281, %p282
      %p284 = scmp.ne.s32.totalorder %s273, %s274
      %p285 = scmp.eq.s32.totalorder %s29, 0
      %p286 = por %p284, %p285
      %p287 = scmp.ne.s32.totalorder %s273, %s274
      %p288 = scmp.eq.s32.totalorder %s30, 1
      %p289 = por %p287, %p288
      %p291 = scmp.ne.s32.totalorder %s274, %s290
      %p292 = scmp.eq.s32.totalorder %s30, 0
      %p293 = por %p291, %p292
      %s294 = ssub.s32 %s32, %s39
      %p295 = scmp.eq.s32.totalorder %s294, 0
      %s297 = sadd.s32 %s296, 1
      %s298 = scalar_select %p295, %s296, %s297
      %p301 = pneg %p295
      %p302 = scmp.eq.s32.totalorder %s24, 1
      %p303 = por %p301, %p302
      %p304 = scmp.ne.s32.totalorder %s296, %s299
      %p305 = scmp.eq.s32.totalorder %s24, 0
      %p306 = por %p304, %p305
      %p307 = scmp.ne.s32.totalorder %s296, %s299
      %p308 = scmp.eq.s32.totalorder %s29, 1
      %p309 = por %p307, %p308
      %p310 = scmp.ne.s32.totalorder %s299, %s300
      %p311 = scmp.eq.s32.totalorder %s29, 0
      %p312 = por %p310, %p311
      %p313 = scmp.ne.s32.totalorder %s299, %s300
      %p314 = scmp.eq.s32.totalorder %s30, 1
      %p315 = por %p313, %p314
      %p317 = scmp.ne.s32.totalorder %s300, %s316
      %p318 = scmp.eq.s32.totalorder %s30, 0
      %p319 = por %p317, %p318
      %s320 = ssub.s32 %s32, %s39
      %p321 = scmp.eq.s32.totalorder %s320, 0
      %s323 = sadd.s32 %s322, 1
      %s324 = scalar_select %p321, %s322, %s323
      %p327 = pneg %p321
      %p328 = scmp.eq.s32.totalorder %s24, 1
      %p329 = por %p327, %p328
      %p330 = scmp.ne.s32.totalorder %s322, %s325
      %p331 = scmp.eq.s32.totalorder %s24, 0
      %p332 = por %p330, %p331
      %p333 = scmp.ne.s32.totalorder %s322, %s325
      %p334 = scmp.eq.s32.totalorder %s29, 1
      %p335 = por %p333, %p334
      %p336 = scmp.ne.s32.totalorder %s325, %s326
      %p337 = scmp.eq.s32.totalorder %s29, 0
      %p338 = por %p336, %p337
      %p339 = scmp.ne.s32.totalorder %s325, %s326
      %p340 = scmp.eq.s32.totalorder %s30, 1
      %p341 = por %p339, %p340
      %p343 = scmp.ne.s32.totalorder %s326, %s342
      %p344 = scmp.eq.s32.totalorder %s30, 0
      %p345 = por %p343, %p344
      %s346 = ssub.s32 %s32, %s39
      %p347 = scmp.eq.s32.totalorder %s346, 0
      %s349 = sadd.s32 %s348, 1
      %s350 = scalar_select %p347, %s348, %s349
      %p353 = pneg %p347
      %p354 = scmp.eq.s32.totalorder %s24, 1
      %p355 = por %p353, %p354
      %p356 = scmp.ne.s32.totalorder %s348, %s351
      %p357 = scmp.eq.s32.totalorder %s24, 0
      %p358 = por %p356, %p357
      %p359 = scmp.ne.s32.totalorder %s348, %s351
      %p360 = scmp.eq.s32.totalorder %s29, 1
      %p361 = por %p359, %p360
      %p362 = scmp.ne.s32.totalorder %s351, %s352
      %p363 = scmp.eq.s32.totalorder %s29, 0
      %p364 = por %p362, %p363
      %p365 = scmp.ne.s32.totalorder %s351, %s352
      %p366 = scmp.eq.s32.totalorder %s30, 1
      %p367 = por %p365, %p366
      %p369 = scmp.ne.s32.totalorder %s352, %s368
      %p370 = scmp.eq.s32.totalorder %s30, 0
      %p371 = por %p369, %p370
      %s372 = ssub.s32 %s32, %s39
      %p373 = scmp.eq.s32.totalorder %s372, 0
      %s375 = sadd.s32 %s374, 1
      %s376 = scalar_select %p373, %s374, %s375
      %p379 = pneg %p373
      %p380 = scmp.eq.s32.totalorder %s24, 1
      %p381 = por %p379, %p380
      %p382 = scmp.ne.s32.totalorder %s374, %s377
      %p383 = scmp.eq.s32.totalorder %s24, 0
      %p384 = por %p382, %p383
      %p385 = scmp.ne.s32.totalorder %s374, %s377
      %p386 = scmp.eq.s32.totalorder %s29, 1
      %p387 = por %p385, %p386
      %p388 = scmp.ne.s32.totalorder %s377, %s378
      %p389 = scmp.eq.s32.totalorder %s29, 0
      %p390 = por %p388, %p389
      %p391 = scmp.ne.s32.totalorder %s377, %s378
      %p392 = scmp.eq.s32.totalorder %s30, 1
      %p393 = por %p391, %p392
      %p395 = scmp.ne.s32.totalorder %s378, %s394
      %p396 = scmp.eq.s32.totalorder %s30, 0
      %p397 = por %p395, %p396
      %s398 = ssub.s32 %s32, %s39
      %p399 = scmp.eq.s32.totalorder %s398, 0
      %s401 = sadd.s32 %s400, 1
      %s402 = scalar_select %p399, %s400, %s401
      %p405 = pneg %p399
      %p406 = scmp.eq.s32.totalorder %s24, 1
      %p407 = por %p405, %p406
      %p408 = scmp.ne.s32.totalorder %s400, %s403
      %p409 = scmp.eq.s32.totalorder %s24, 0
      %p410 = por %p408, %p409
      %p411 = scmp.ne.s32.totalorder %s400, %s403
      %p412 = scmp.eq.s32.totalorder %s29, 1
      %p413 = por %p411, %p412
      %p414 = scmp.ne.s32.totalorder %s403, %s404
      %p415 = scmp.eq.s32.totalorder %s29, 0
      %p416 = por %p414, %p415
      %p417 = scmp.ne.s32.totalorder %s403, %s404
      %p418 = scmp.eq.s32.totalorder %s30, 1
      %p419 = por %p417, %p418
      %p421 = scmp.ne.s32.totalorder %s404, %s420
      %p422 = scmp.eq.s32.totalorder %s30, 0
      %p423 = por %p421, %p422
      %s425 = sadd.s32 %s424, 1
      %p428 = scmp.eq.s32.totalorder %s24, 1
      %p429 = scmp.ne.s32.totalorder %s424, %s426
      %p430 = scmp.eq.s32.totalorder %s24, 0
      %p431 = por %p429, %p430
      %p432 = scmp.ne.s32.totalorder %s424, %s426
      %p433 = scmp.eq.s32.totalorder %s29, 1
      %p434 = por %p432, %p433
      %p435 = scmp.ne.s32.totalorder %s426, %s427
      %p436 = scmp.eq.s32.totalorder %s29, 0
      %p437 = por %p435, %p436
      %p438 = scmp.ne.s32.totalorder %s426, %s427
      %p439 = scmp.eq.s32.totalorder %s30, 1
      %p440 = por %p438, %p439
      %p442 = scmp.ne.s32.totalorder %s427, %s441
      %p443 = scmp.eq.s32.totalorder %s30, 0
      %p444 = por %p442, %p443
      %s446 = sadd.s32 %s445, 1
      %p449 = scmp.eq.s32.totalorder %s24, 1
      %p450 = scmp.ne.s32.totalorder %s445, %s447
      %p451 = scmp.eq.s32.totalorder %s24, 0
      %p452 = por %p450, %p451
      %p453 = scmp.ne.s32.totalorder %s445, %s447
      %p454 = scmp.eq.s32.totalorder %s29, 1
      %p455 = por %p453, %p454
      %p456 = scmp.ne.s32.totalorder %s447, %s448
      %p457 = scmp.eq.s32.totalorder %s29, 0
      %p458 = por %p456, %p457
      %p459 = scmp.ne.s32.totalorder %s447, %s448
      %p460 = scmp.eq.s32.totalorder %s30, 1
      %p461 = por %p459, %p460
      %p463 = scmp.ne.s32.totalorder %s448, %s462
      %p464 = scmp.eq.s32.totalorder %s30, 0
      %p465 = por %p463, %p464
      %s466 = ssub.s32 %s31, %s43
      %p467 = scmp.eq.s32.totalorder %s466, 0
      %s469 = sadd.s32 %s468, 1
      %s470 = scalar_select %p467, %s468, %s469
      %p473 = pneg %p467
      %p474 = scmp.eq.s32.totalorder %s24, 1
      %p475 = por %p473, %p474
      %p476 = scmp.ne.s32.totalorder %s468, %s471
      %p477 = scmp.eq.s32.totalorder %s24, 0
      %p478 = por %p476, %p477
      %p479 = scmp.ne.s32.totalorder %s468, %s471
      %p480 = scmp.eq.s32.totalorder %s29, 1
      %p481 = por %p479, %p480
      %p482 = scmp.ne.s32.totalorder %s471, %s472
      %p483 = scmp.eq.s32.totalorder %s29, 0
      %p484 = por %p482, %p483
      %p485 = scmp.ne.s32.totalorder %s471, %s472
      %p486 = scmp.eq.s32.totalorder %s30, 1
      %p487 = por %p485, %p486
      %p489 = scmp.ne.s32.totalorder %s472, %s488
      %p490 = scmp.eq.s32.totalorder %s30, 0
      %p491 = por %p489, %p490
      %p492 = scmp.le.s32.totalorder 1, %s24
      %p493 = scmp.lt.s32.totalorder %s24, 3
      %p494 = pnand %p492, %p493
      %p495 = pneg %p494
      // Predicated region
      $region9: #{tpu_custom_call.1} parent=5 // pred_check
        _
      $region10: #{tpu_custom_call.1} parent=5 // pred_check_branch
        %497 = sbr.rel (%p494) target = $region12
      $region11: #{tpu_custom_call.1} parent=5 // pred_region
        %s498 = ssub.s32 %s24, 1
        // Predicated region
        $region13: #{tpu_custom_call.1} parent=11 // pred_check
          %p499 = pneg %p62
        $region14: #{tpu_custom_call.1} parent=11 // pred_check_branch
          %501 = sbr.rel (%p499) target = $region16
        $region15: #{tpu_custom_call.1} parent=11 // pred_region
          %s502 = smul.u32 2, %s33
          %p503 = scmp.lt.s32.totalorder %s502, 1
          %s504 = scalar_select %p503, %s502, 1
          %s505 = smul.addr %s504, 2
          %s506 = smul.addr %s505, 8
          %s507 = scalar_lea.vmem %s0, %s506
          %s508 = smul.u32 2, %s33
        $region16: #{tpu_custom_call.1} parent=11 // pred_fallthru
          _
        // Predicated region
        $region17: #{tpu_custom_call.1} parent=11 // pred_check
          %p509 = pneg %p83
        $region18: #{tpu_custom_call.1} parent=11 // pred_check_branch
          %511 = sbr.rel (%p509) target = $region20
        $region19: #{tpu_custom_call.1} parent=11 // pred_region
          _
        $region20: #{tpu_custom_call.1} parent=11 // pred_fallthru
          _
        // Predicated region
        $region21: #{tpu_custom_call.1} parent=11 // pred_check
          %p512 = pneg %p104
        $region22: #{tpu_custom_call.1} parent=11 // pred_check_branch
          %514 = sbr.rel (%p512) target = $region24
        $region23: #{tpu_custom_call.1} parent=11 // pred_region
          _
        $region24: #{tpu_custom_call.1} parent=11 // pred_fallthru
          _
        // Predicated region
        $region25: #{tpu_custom_call.1} parent=11 // pred_check
          %p515 = pneg %p437
        $region26: #{tpu_custom_call.1} parent=11 // pred_check_branch
          %517 = sbr.rel (%p515) target = $region28
        $region27: #{tpu_custom_call.1} parent=11 // pred_region
          _
        $region28: #{tpu_custom_call.1} parent=11 // pred_fallthru
          _
        // Predicated region
        $region29: #{tpu_custom_call.1} parent=11 // pred_check
          %p518 = pneg %p458
        $region30: #{tpu_custom_call.1} parent=11 // pred_check_branch
          %520 = sbr.rel (%p518) target = $region32
        $region31: #{tpu_custom_call.1} parent=11 // pred_region
          _
        $region32: #{tpu_custom_call.1} parent=11 // pred_fallthru
          _
      $region12: #{tpu_custom_call.1} parent=5 // pred_fallthru
        _
      %p521 = scmp.lt.s32.totalorder %s24, 2
      // Predicated region
      $region33: #{tpu_custom_call.1} parent=5 // pred_check
        %p522 = pneg %p521
      $region34: #{tpu_custom_call.1} parent=5 // pred_check_branch
        %524 = sbr.rel (%p522) target = $region36
      $region35: #{tpu_custom_call.1} parent=5 // pred_region
        // Predicated region
        $region37: #{tpu_custom_call.1} parent=35 // pred_check
          %p525 = pneg %p124
        $region38: #{tpu_custom_call.1} parent=35 // pred_check_branch
          %527 = sbr.rel (%p525) target = $region40
        $region39: #{tpu_custom_call.1} parent=35 // pred_region
          %p528 = scmp.lt.s32.totalorder %s32, 1
          %s529 = scalar_select %p528, %s32, 1
          %s530 = scalar_lea.vmem %s3, %s529
        $region40: #{tpu_custom_call.1} parent=35 // pred_fallthru
          _
        // Predicated region
        $region41: #{tpu_custom_call.1} parent=35 // pred_check
          %p531 = pneg %p150
        $region42: #{tpu_custom_call.1} parent=35 // pred_check_branch
          %533 = sbr.rel (%p531) target = $region44
        $region43: #{tpu_custom_call.1} parent=35 // pred_region
          %p534 = scmp.lt.s32.totalorder %s32, 1
          %s535 = scalar_select %p534, %s32, 1
          %s536 = scalar_lea.vmem %s4, %s535
        $region44: #{tpu_custom_call.1} parent=35 // pred_fallthru
          _
        // Predicated region
        $region45: #{tpu_custom_call.1} parent=35 // pred_check
          %p537 = pneg %p176
        $region46: #{tpu_custom_call.1} parent=35 // pred_check_branch
          %539 = sbr.rel (%p537) target = $region48
        $region47: #{tpu_custom_call.1} parent=35 // pred_region
          %p540 = scmp.lt.s32.totalorder %s32, 1
          %s541 = scalar_select %p540, %s32, 1
          %s542 = smul.addr %s541, 2
          %s543 = smul.addr %s542, 8
          %s544 = scalar_lea.vmem %s5, %s543
        $region48: #{tpu_custom_call.1} parent=35 // pred_fallthru
          _
        // Predicated region
        $region49: #{tpu_custom_call.1} parent=35 // pred_check
          %p545 = pneg %p202
        $region50: #{tpu_custom_call.1} parent=35 // pred_check_branch
          %547 = sbr.rel (%p545) target = $region52
        $region51: #{tpu_custom_call.1} parent=35 // pred_region
          %p548 = scmp.lt.s32.totalorder %s32, 1
          %s549 = scalar_select %p548, %s32, 1
          %s550 = smul.addr %s549, 2
          %s551 = smul.addr %s550, 8
          %s552 = scalar_lea.vmem %s6, %s551
        $region52: #{tpu_custom_call.1} parent=35 // pred_fallthru
          _
        // Predicated region
        $region53: #{tpu_custom_call.1} parent=35 // pred_check
          %p553 = pneg %p228
        $region54: #{tpu_custom_call.1} parent=35 // pred_check_branch
          %555 = sbr.rel (%p553) target = $region56
        $region55: #{tpu_custom_call.1} parent=35 // pred_region
          %p556 = scmp.lt.s32.totalorder %s32, 1
          %s557 = scalar_select %p556, %s32, 1
          %s558 = smul.addr %s557, 2
          %s559 = smul.addr %s558, 8
          %s560 = scalar_lea.vmem %s7, %s559
        $region56: #{tpu_custom_call.1} parent=35 // pred_fallthru
          _
        // Predicated region
        $region57: #{tpu_custom_call.1} parent=35 // pred_check
          %p561 = pneg %p254
        $region58: #{tpu_custom_call.1} parent=35 // pred_check_branch
          %563 = sbr.rel (%p561) target = $region60
        $region59: #{tpu_custom_call.1} parent=35 // pred_region
          %p564 = scmp.lt.s32.totalorder %s32, 1
          %s565 = scalar_select %p564, %s32, 1
          %s566 = smul.addr %s565, 2
          %s567 = smul.addr %s566, 8
          %s568 = scalar_lea.vmem %s8, %s567
        $region60: #{tpu_custom_call.1} parent=35 // pred_fallthru
          _
        // Predicated region
        $region61: #{tpu_custom_call.1} parent=35 // pred_check
          %p569 = pneg %p280
        $region62: #{tpu_custom_call.1} parent=35 // pred_check_branch
          %571 = sbr.rel (%p569) target = $region64
        $region63: #{tpu_custom_call.1} parent=35 // pred_region
          %p572 = scmp.lt.s32.totalorder %s32, 1
          %s573 = scalar_select %p572, %s32, 1
          %s574 = scalar_lea.vmem %s9, %s573
        $region64: #{tpu_custom_call.1} parent=35 // pred_fallthru
          _
        // Predicated region
        $region65: #{tpu_custom_call.1} parent=35 // pred_check
          %p575 = pneg %p306
        $region66: #{tpu_custom_call.1} parent=35 // pred_check_branch
          %577 = sbr.rel (%p575) target = $region68
        $region67: #{tpu_custom_call.1} parent=35 // pred_region
          %p578 = scmp.lt.s32.totalorder %s32, 1
          %s579 = scalar_select %p578, %s32, 1
          %s580 = scalar_lea.vmem %s10, %s579
        $region68: #{tpu_custom_call.1} parent=35 // pred_fallthru
          _
        // Predicated region
        $region69: #{tpu_custom_call.1} parent=35 // pred_check
          %p581 = pneg %p332
        $region70: #{tpu_custom_call.1} parent=35 // pred_check_branch
          %583 = sbr.rel (%p581) target = $region72
        $region71: #{tpu_custom_call.1} parent=35 // pred_region
          %p584 = scmp.lt.s32.totalorder %s32, 1
          %s585 = scalar_select %p584, %s32, 1
          %s586 = smul.addr %s585, 4
          %s587 = smul.addr %s586, 8
          %s588 = scalar_lea.vmem %s11, %s587
        $region72: #{tpu_custom_call.1} parent=35 // pred_fallthru
          _
        // Predicated region
        $region73: #{tpu_custom_call.1} parent=35 // pred_check
          %p589 = pneg %p358
        $region74: #{tpu_custom_call.1} parent=35 // pred_check_branch
          %591 = sbr.rel (%p589) target = $region76
        $region75: #{tpu_custom_call.1} parent=35 // pred_region
          %p592 = scmp.lt.s32.totalorder %s32, 1
          %s593 = scalar_select %p592, %s32, 1
          %s594 = scalar_lea.vmem %s12, %s593
        $region76: #{tpu_custom_call.1} parent=35 // pred_fallthru
          _
        // Predicated region
        $region77: #{tpu_custom_call.1} parent=35 // pred_check
          %p595 = pneg %p384
        $region78: #{tpu_custom_call.1} parent=35 // pred_check_branch
          %597 = sbr.rel (%p595) target = $region80
        $region79: #{tpu_custom_call.1} parent=35 // pred_region
          %p598 = scmp.lt.s32.totalorder %s32, 1
          %s599 = scalar_select %p598, %s32, 1
          %s600 = smul.addr %s599, 16
          %s601 = smul.addr %s600, 8
          %s602 = scalar_lea.vmem %s13, %s601
        $region80: #{tpu_custom_call.1} parent=35 // pred_fallthru
          _
        // Predicated region
        $region81: #{tpu_custom_call.1} parent=35 // pred_check
          %p603 = pneg %p410
        $region82: #{tpu_custom_call.1} parent=35 // pred_check_branch
          %605 = sbr.rel (%p603) target = $region84
        $region83: #{tpu_custom_call.1} parent=35 // pred_region
          %p606 = scmp.lt.s32.totalorder %s32, 1
          %s607 = scalar_select %p606, %s32, 1
          %s608 = scalar_lea.vmem %s14, %s607
        $region84: #{tpu_custom_call.1} parent=35 // pred_fallthru
          _
      $region36: #{tpu_custom_call.1} parent=5 // pred_fallthru
        _
      %p609 = scmp.le.s32.totalorder 1, %s24
      %p610 = scmp.lt.s32.totalorder %s24, 3
      %p611 = pnand %p609, %p610
      %p612 = pneg %p611
      // Predicated region
      $region85: #{tpu_custom_call.1} parent=5 // pred_check
        _
      $region86: #{tpu_custom_call.1} parent=5 // pred_check_branch
        %614 = sbr.rel (%p611) target = $region88
      $region87: #{tpu_custom_call.1} parent=5 // pred_region
        %s615 = ssub.s32 %s24, 1
        %s616 = smul.u32 2, %s33
        %p617 = scmp.lt.s32.totalorder %s616, 1
        %s618 = scalar_select %p617, %s616, 1
        %s619 = smul.addr %s618, 2
        %s620 = smul.addr %s619, 8
        %s621 = scalar_lea.vmem %s0, %s620
        %p622 = pneg %p62
        %p623 = pneg %p59
        %p624 = pneg %p83
        %p625 = pneg %p80
        %p626 = pneg %p104
        %p627 = pneg %p101
        %p628 = scmp.lt.s32.totalorder %s34, 1
        %s629 = scalar_select %p628, %s34, 1
        %s630 = scalar_lea.vmem %s3, %s629
        %p631 = pneg %p130
        %p632 = pneg %p127
        %p633 = scmp.lt.s32.totalorder %s34, 1
        %s634 = scalar_select %p633, %s34, 1
        %s635 = scalar_lea.vmem %s4, %s634
        %p636 = pneg %p156
        %p637 = pneg %p153
        %p638 = scmp.lt.s32.totalorder %s34, 1
        %s639 = scalar_select %p638, %s34, 1
        %s640 = smul.addr %s639, 2
        %s641 = smul.addr %s640, 8
        %s642 = scalar_lea.vmem %s5, %s641
        %p643 = pneg %p182
        %p644 = pneg %p179
        %p645 = scmp.lt.s32.totalorder %s34, 1
        %s646 = scalar_select %p645, %s34, 1
        %s647 = smul.addr %s646, 2
        %s648 = smul.addr %s647, 8
        %s649 = scalar_lea.vmem %s6, %s648
        %p650 = pneg %p208
        %p651 = pneg %p205
        %p652 = scmp.lt.s32.totalorder %s34, 1
        %s653 = scalar_select %p652, %s34, 1
        %s654 = smul.addr %s653, 2
        %s655 = smul.addr %s654, 8
        %s656 = scalar_lea.vmem %s7, %s655
        %p657 = pneg %p234
        %p658 = pneg %p231
        %p659 = scmp.lt.s32.totalorder %s34, 1
        %s660 = scalar_select %p659, %s34, 1
        %s661 = smul.addr %s660, 2
        %s662 = smul.addr %s661, 8
        %s663 = scalar_lea.vmem %s8, %s662
        %p664 = pneg %p260
        %p665 = pneg %p257
        %p666 = scmp.lt.s32.totalorder %s34, 1
        %s667 = scalar_select %p666, %s34, 1
        %s668 = scalar_lea.vmem %s9, %s667
        %p669 = pneg %p286
        %p670 = pneg %p283
        %p671 = scmp.lt.s32.totalorder %s34, 1
        %s672 = scalar_select %p671, %s34, 1
        %s673 = scalar_lea.vmem %s10, %s672
        %p674 = pneg %p312
        %p675 = pneg %p309
        %p676 = scmp.lt.s32.totalorder %s34, 1
        %s677 = scalar_select %p676, %s34, 1
        %s678 = smul.addr %s677, 4
        %s679 = smul.addr %s678, 8
        %s680 = scalar_lea.vmem %s11, %s679
        %p681 = pneg %p338
        %p682 = pneg %p335
        %p683 = scmp.lt.s32.totalorder %s34, 1
        %s684 = scalar_select %p683, %s34, 1
        %s685 = scalar_lea.vmem %s12, %s684
        %p686 = pneg %p364
        %p687 = pneg %p361
        %p688 = scmp.lt.s32.totalorder %s34, 1
        %s689 = scalar_select %p688, %s34, 1
        %s690 = smul.addr %s689, 16
        %s691 = smul.addr %s690, 8
        %s692 = scalar_lea.vmem %s13, %s691
        %p693 = pneg %p390
        %p694 = pneg %p387
        %p695 = scmp.lt.s32.totalorder %s34, 1
        %s696 = scalar_select %p695, %s34, 1
        %s697 = scalar_lea.vmem %s14, %s696
        %p698 = pneg %p416
        %p699 = pneg %p413
        %p700 = pneg %p437
        %p701 = pneg %p434
        %p702 = pneg %p458
        %p703 = pneg %p455
        %p704 = pneg %p484
        %p705 = pneg %p481
        %s706 = smul.u32 2, %s33
        %p707 = scmp.lt.s32.totalorder %s706, 1
        %s708 = scalar_select %p707, %s706, 1
        %s709 = smul.addr %s708, 2
        %s710 = smul.addr %s709, 8
        %s711 = scalar_lea.vmem %s0, %s710
        %s712 = smul.u32 2, %s33
        %p713 = scmp.lt.s32.totalorder %s34, 1
        %s714 = scalar_select %p713, %s34, 1
        %s715 = scalar_lea.vmem %s3, %s714
        %p716 = scmp.lt.s32.totalorder %s34, 1
        %s717 = scalar_select %p716, %s34, 1
        %s718 = scalar_lea.vmem %s4, %s717
        %p719 = scmp.lt.s32.totalorder %s34, 1
        %s720 = scalar_select %p719, %s34, 1
        %s721 = smul.addr %s720, 2
        %s722 = smul.addr %s721, 8
        %s723 = scalar_lea.vmem %s5, %s722
        %p724 = scmp.lt.s32.totalorder %s34, 1
        %s725 = scalar_select %p724, %s34, 1
        %s726 = smul.addr %s725, 2
        %s727 = smul.addr %s726, 8
        %s728 = scalar_lea.vmem %s6, %s727
        %p729 = scmp.lt.s32.totalorder %s34, 1
        %s730 = scalar_select %p729, %s34, 1
        %s731 = smul.addr %s730, 2
        %s732 = smul.addr %s731, 8
        %s733 = scalar_lea.vmem %s7, %s732
        %p734 = scmp.lt.s32.totalorder %s34, 1
        %s735 = scalar_select %p734, %s34, 1
        %s736 = smul.addr %s735, 2
        %s737 = smul.addr %s736, 8
        %s738 = scalar_lea.vmem %s8, %s737
        %p739 = scmp.lt.s32.totalorder %s34, 1
        %s740 = scalar_select %p739, %s34, 1
        %s741 = scalar_lea.vmem %s9, %s740
        %p742 = scmp.lt.s32.totalorder %s34, 1
        %s743 = scalar_select %p742, %s34, 1
        %s744 = scalar_lea.vmem %s10, %s743
        %p745 = scmp.lt.s32.totalorder %s34, 1
        %s746 = scalar_select %p745, %s34, 1
        %s747 = smul.addr %s746, 4
        %s748 = smul.addr %s747, 8
        %s749 = scalar_lea.vmem %s11, %s748
        %p750 = scmp.lt.s32.totalorder %s34, 1
        %s751 = scalar_select %p750, %s34, 1
        %s752 = scalar_lea.vmem %s12, %s751
        %p753 = scmp.lt.s32.totalorder %s34, 1
        %s754 = scalar_select %p753, %s34, 1
        %s755 = smul.addr %s754, 16
        %s756 = smul.addr %s755, 8
        %s757 = scalar_lea.vmem %s13, %s756
        %p758 = scmp.lt.s32.totalorder %s34, 1
        %s759 = scalar_select %p758, %s34, 1
        %s760 = scalar_lea.vmem %s14, %s759
        %p761 = scmp.eq.s32.totalorder %s34, 0
        // Predicated region
        $region89: #{tpu_custom_call.1} parent=87 // pred_check
          %p762 = pneg %p761
        $region90: #{tpu_custom_call.1} parent=87 // pred_check_branch
          %764 = sbr.rel (%p762) target = $region92
        $region91: #{tpu_custom_call.1} parent=87 // pred_region
          %v765 = vld [vmem:[%s711] sm:$0xff]
          %v766 = vld [vmem:[%s711 + $0x8] sm:$0xff]
          %v767 = vld [vmem:[%s711 + $0x10] sm:$0xff]
          %v768 = vld [vmem:[%s711 + $0x18] sm:$0xff]
          %v769 = vld [vmem:[%s1] sm:$0xff]
          %v770 = vld [vmem:[%s1 + $0x8] sm:$0xff]
          %v771 = vld [vmem:[%s1 + $0x10] sm:$0xff]
          %v772 = vld [vmem:[%s1 + $0x18] sm:$0xff]
          %v773 = vld [vmem:[%s1 + $0x20] sm:$0xff]
          %v774 = vld [vmem:[%s1 + $0x28] sm:$0xff]
          %v775 = vld [vmem:[%s2] sm:$0x1]
          %v777 = vlaneseq
          %v778 = vshrl.u32 %v777, 7
          %v779 = vsub.s32 0, %v778
          %v780 = vrot.slane %v775, %v779
          %vm782 = vcmask 392192
          %v784 = vsel %vm782, %v765, 0
          %v787 = vsel %vm782, %v766, 0
          %v790 = vsel %vm782, %v767, 0
          %v793 = vsel %vm782, %v768, 0
          %795 = vmatprep.subr.mxu0 0.0
          %796 = vmatpush1.msra.mxu0 %v769
          %797 = vmatprep.subr.mxu0 0.0
          %798 = vmatpush1.msra.mxu0 %v770
          %799 = vmatprep.subr.mxu0 0.0
          %800 = vmatpush1.msra.mxu0 %v771
          %801 = vmatprep.subr.mxu0 0.0
          %802 = vmatpush1.msra.mxu0 %v772
          %803 = vmatprep.subr.mxu0 0.0
          %804 = vmatpush1.msra.mxu0 %v773
          %805 = vmatprep.subr.mxu0 0.0
          %806 = vmatpush1.msra.mxu0 %v774
          %807 = vmatprep.subr.mxu0 0.0
          %808 = vmatpush1.msra.mxu0 0.0
          %809 = vmatprep.subr.mxu0 0.0
          %810 = vmatpush1.msra.mxu0 0.0
          %811 = vmatprep.subr.mxu0 0.0
          %812 = vmatpush1.msra.mxu0 0.0
          %813 = vmatprep.subr.mxu0 0.0
          %814 = vmatpush1.msra.mxu0 0.0
          %815 = vmatprep.subr.mxu0 0.0
          %816 = vmatpush1.msra.mxu0 0.0
          %817 = vmatprep.subr.mxu0 0.0
          %818 = vmatpush1.msra.mxu0 0.0
          %819 = vmatprep.subr.mxu0 0.0
          %820 = vmatpush1.msra.mxu0 0.0
          %821 = vmatprep.subr.mxu0 0.0
          %822 = vmatpush1.msra.mxu0 0.0
          %823 = vmatprep.subr.mxu0 0.0
          %824 = vmatpush1.msra.mxu0 0.0
          %825 = vmatprep.subr.mxu0 0.0
          %826 = vmatpush1.msra.mxu0 0.0
          %827 = vmatprep.subr.mxu0 0.0
          %828 = vmatpush1.msra.mxu0 0.0
          %829 = vmatprep.subr.mxu0 0.0
          %830 = vmatpush1.msra.mxu0 0.0
          %831 = vmatprep.subr.mxu0 0.0
          %832 = vmatpush1.msra.mxu0 0.0
          %833 = vmatprep.subr.mxu0 0.0
          %834 = vmatpush1.msra.mxu0 0.0
          %835 = vmatprep.subr.mxu0 0.0
          %836 = vmatpush1.msra.mxu0 0.0
          %837 = vmatprep.subr.mxu0 0.0
          %838 = vmatpush1.msra.mxu0 0.0
          %839 = vmatprep.subr.mxu0 0.0
          %840 = vmatpush1.msra.mxu0 0.0
          %841 = vmatprep.subr.mxu0 0.0
          %842 = vmatpush1.msra.mxu0 0.0
          %843 = vmatprep.subr.mxu0 0.0
          %844 = vmatpush1.msra.mxu0 0.0
          %845 = vmatprep.subr.mxu0 0.0
          %846 = vmatpush1.msra.mxu0 0.0
          %847 = vmatprep.subr.mxu0 0.0
          %848 = vmatpush1.msra.mxu0 0.0
          %849 = vmatprep.subr.mxu0 0.0
          %850 = vmatpush1.msra.mxu0 0.0
          %851 = vmatprep.subr.mxu0 0.0
          %852 = vmatpush1.msra.mxu0 0.0
          %853 = vmatprep.subr.mxu0 0.0
          %854 = vmatpush1.msra.mxu0 0.0
          %855 = vmatprep.subr.mxu0 0.0
          %856 = vmatpush1.msra.mxu0 0.0
          %857 = vmatprep.subr.mxu0 0.0
          %858 = vmatpush1.msra.mxu0 0.0
          %859 = vmatprep.mubr.f32.mxu0 0.0
          %860 = vmatmul.mubr.f32.gmra.mrb[0].mxu0 %v784
          %v861 = vpop.f32.mrb[0].mxu0
          %v862 = vadd.f32 %v780, %v861
          %v863 = vpop.f32.mrb[0].mxu0
          %864 = vmatprep.mubr.f32.mxu0 0.0
          %865 = vmatmul.mubr.f32.gmra.mrb[0].mxu0 %v787
          %v866 = vpop.f32.mrb[0].mxu0
          %v867 = vadd.f32 %v780, %v866
          %v868 = vpop.f32.mrb[0].mxu0
          %869 = vmatprep.mubr.f32.mxu0 0.0
          %870 = vmatmul.mubr.f32.gmra.mrb[0].mxu0 %v790
          %v871 = vpop.f32.mrb[0].mxu0
          %v872 = vadd.f32 %v780, %v871
          %v873 = vpop.f32.mrb[0].mxu0
          %874 = vmatprep.mubr.f32.mxu0 0.0
          %875 = vmatmul.mubr.f32.gmra.mrb[0].mxu0 %v793
          %v876 = vpop.f32.mrb[0].mxu0
          %v877 = vadd.f32 %v780, %v876
          %v878 = vpop.f32.mrb[0].mxu0
          %879 = vdwg.mxu0
          %vm880 = vcmask 261120
          %881 = vst.msk [vmem:[#allocation2] sm:$0xff] %vm880, %v862
          %882 = vst.msk [vmem:[#allocation2 + $0x8] sm:$0xff] %vm880, %v867
          %883 = vst.msk [vmem:[#allocation2 + $0x10] sm:$0xff] %vm880, %v872
          %884 = vst.msk [vmem:[#allocation2 + $0x18] sm:$0xff] %vm880, %v877
        $region92: #{tpu_custom_call.1} parent=87 // pred_fallthru
          _
        %v885 = vld [vmem:[#allocation2] sm:$0xff]
        %v886 = vld [vmem:[#allocation2 + $0x8] sm:$0xff]
        %v887 = vld [vmem:[#allocation2 + $0x10] sm:$0xff]
        %v888 = vld [vmem:[#allocation2 + $0x18] sm:$0xff]
        %v889 = vld [vmem:[%s715] sm:$0x1]
        %v890 = vld [vmem:[%s718] sm:$0x1]
        %v891 = vld [vmem:[%s741] sm:$0x1]
        %v892 = vld [vmem:[%s744] sm:$0x1]
        %v893 = vld [vmem:[%s723] sm:$0xff]
        %v894 = vld [vmem:[%s723 + $0x8] sm:$0xff]
        %v895 = vld [vmem:[%s733] sm:$0xff]
        %v896 = vld [vmem:[%s733 + $0x8] sm:$0xff]
        %v897 = vld [vmem:[%s728] sm:$0xff]
        %v898 = vld [vmem:[%s728 + $0x8] sm:$0xff]
        %v899 = vld [vmem:[%s738] sm:$0xff]
        %v900 = vld [vmem:[%s738 + $0x8] sm:$0xff]
        %v901 = vld [vmem:[%s749] sm:$0xff]
        %v902 = vld [vmem:[%s749 + $0x8] sm:$0xff]
        %v903 = vld [vmem:[%s749 + $0x10] sm:$0xff]
        %v904 = vld [vmem:[%s749 + $0x18] sm:$0xff]
        %v905 = vld [vmem:[%s752] sm:$0x1]
        %v906 = vld [vmem:[%s757] sm:$0xff]
        %v907 = vld [vmem:[%s757 + $0x8] sm:$0xff]
        %v908 = vld [vmem:[%s757 + $0x10] sm:$0xff]
        %v909 = vld [vmem:[%s757 + $0x18] sm:$0xff]
        %v910 = vld [vmem:[%s757 + $0x20] sm:$0xff]
        %v911 = vld [vmem:[%s757 + $0x28] sm:$0xff]
        %v912 = vld [vmem:[%s757 + $0x30] sm:$0xff]
        %v913 = vld [vmem:[%s757 + $0x38] sm:$0xff]
        %v914 = vld [vmem:[%s757 + $0x40] sm:$0xff]
        %v915 = vld [vmem:[%s757 + $0x48] sm:$0xff]
        %v916 = vld [vmem:[%s757 + $0x50] sm:$0xff]
        %v917 = vld [vmem:[%s757 + $0x58] sm:$0xff]
        %v918 = vld [vmem:[%s757 + $0x60] sm:$0xff]
        %v919 = vld [vmem:[%s757 + $0x68] sm:$0xff]
        %v920 = vld [vmem:[%s757 + $0x70] sm:$0xff]
        %v921 = vld [vmem:[%s757 + $0x78] sm:$0xff]
        %v922 = vld [vmem:[%s760] sm:$0x1]
        %vm923 = vcmask 261120
        %v924 = vsel %vm923, %v885, 0.0
        %925 = vadd.xlane.f32.xlu0 %v924
        %v926 = vpop.xlane.xlu0 %925
        %v927 = vsel %vm923, %v886, 0.0
        %928 = vadd.xlane.f32.xlu0 %v927
        %v929 = vpop.xlane.xlu0 %928
        %v930 = vsel %vm923, %v887, 0.0
        %931 = vadd.xlane.f32.xlu0 %v930
        %v932 = vpop.xlane.xlu0 %931
        %v933 = vsel %vm923, %v888, 0.0
        %934 = vadd.xlane.f32.xlu0 %v933
        %v935 = vpop.xlane.xlu0 %934
        %v936 = vmul.f32 %v885, %v885
        %v937 = vmul.f32 %v886, %v886
        %v938 = vmul.f32 %v887, %v887
        %v939 = vmul.f32 %v888, %v888
        %v940 = vsel %vm923, %v936, 0.0
        %941 = vadd.xlane.f32.xlu0 %v940
        %v942 = vpop.xlane.xlu0 %941
        %v943 = vsel %vm923, %v937, 0.0
        %944 = vadd.xlane.f32.xlu0 %v943
        %v945 = vpop.xlane.xlu0 %944
        %v946 = vsel %vm923, %v938, 0.0
        %947 = vadd.xlane.f32.xlu0 %v946
        %v948 = vpop.xlane.xlu0 %947
        %v949 = vsel %vm923, %v939, 0.0
        %950 = vadd.xlane.f32.xlu0 %v949
        %v951 = vpop.xlane.xlu0 %950
        %v952 = vmul.f32 %v926, 0.03125
        %v953 = vmul.f32 %v929, 0.03125
        %v954 = vmul.f32 %v932, 0.03125
        %v955 = vmul.f32 %v935, 0.03125
        %v956 = vmul.f32 %v942, 0.03125
        %v957 = vmul.f32 %v945, 0.03125
        %v958 = vmul.f32 %v948, 0.03125
        %v959 = vmul.f32 %v951, 0.03125
        %v960 = vmul.f32 %v952, %v952
        %v961 = vmul.f32 %v953, %v953
        %v962 = vmul.f32 %v954, %v954
        %v963 = vmul.f32 %v955, %v955
        %v964 = vsub.f32 %v956, %v960
        %v965 = vsub.f32 %v957, %v961
        %v966 = vsub.f32 %v958, %v962
        %v967 = vsub.f32 %v959, %v963
        %v968 = vmax.f32 %v964, 0.0
        %v969 = vmax.f32 %v965, 0.0
        %v970 = vmax.f32 %v966, 0.0
        %v971 = vmax.f32 %v967, 0.0
        %v972 = vsub.f32 %v885, %v952
        %v973 = vsub.f32 %v886, %v953
        %v974 = vsub.f32 %v887, %v954
        %v975 = vsub.f32 %v888, %v955
        %v976 = vadd.f32 %v968, 1e-05
        %v977 = vadd.f32 %v969, 1e-05
        %v978 = vadd.f32 %v970, 1e-05
        %v979 = vadd.f32 %v971, 1e-05
        %v980 = vrsqrt.pop %v976
        %v981 = vrsqrt.pop %v977
        %v982 = vrsqrt.pop %v978
        %v983 = vrsqrt.pop %v979
        %v984 = vmul.f32 %v972, %v980
        %v985 = vmul.f32 %v973, %v981
        %v986 = vmul.f32 %v974, %v982
        %v987 = vmul.f32 %v975, %v983
        %v989 = vlaneseq
        %v990 = vshrl.u32 %v989, 7
        %v991 = vsub.s32 0, %v990
        %v992 = vrot.slane %v889, %v991
        %v994 = vmul.f32 %v984, %v992
        %v995 = vmul.f32 %v985, %v992
        %v996 = vmul.f32 %v986, %v992
        %v997 = vmul.f32 %v987, %v992
        %v999 = vlaneseq
        %v1000 = vshrl.u32 %v999, 7
        %v1001 = vsub.s32 0, %v1000
        %v1002 = vrot.slane %v890, %v1001
        %v1004 = vadd.f32 %v994, %v1002
        %v1005 = vadd.f32 %v995, %v1002
        %v1006 = vadd.f32 %v996, %v1002
        %v1007 = vadd.f32 %v997, %v1002
        %1009 = vset.pattern.permute.xlu0 0
        %1010 = vperm.xlu0 %1009, %v897
        %v1011 = vpop.permute.xlu0 %1010
        %1014 = vset.pattern.permute.xlu0 0
        %1015 = vperm.xlu0 %1014, %v898
        %v1016 = vpop.permute.xlu0 %1015
        %1019 = vset.pattern.permute.xlu0 0
        %1020 = vperm.xlu0 %1019, %v899
        %v1021 = vpop.permute.xlu0 %1020
        %1024 = vset.pattern.permute.xlu0 0
        %1025 = vperm.xlu0 %1024, %v900
        %v1026 = vpop.permute.xlu0 %1025
        %vm1028 = vcmask 130048
        %v1030 = vsel %vm1028, %v893, 0
        %v1033 = vsel %vm1028, %v894, 0
        %1035 = vmatprep.subr.mxu0 0.0
        %1036 = vmatpush1.msra.mxu0 %v1004
        %1037 = vmatprep.subr.mxu0 0.0
        %1038 = vmatpush1.msra.mxu0 %v1005
        %1039 = vmatprep.subr.mxu0 0.0
        %1040 = vmatpush1.msra.mxu0 0.0
        %1041 = vmatprep.subr.mxu0 0.0
        %1042 = vmatpush1.msra.mxu0 0.0
        %1043 = vmatprep.subr.mxu0 0.0
        %1044 = vmatpush1.msra.mxu0 0.0
        %1045 = vmatprep.subr.mxu0 0.0
        %1046 = vmatpush1.msra.mxu0 0.0
        %1047 = vmatprep.subr.mxu0 0.0
        %1048 = vmatpush1.msra.mxu0 0.0
        %1049 = vmatprep.subr.mxu0 0.0
        %1050 = vmatpush1.msra.mxu0 0.0
        %1051 = vmatprep.subr.mxu0 0.0
        %1052 = vmatpush1.msra.mxu0 0.0
        %1053 = vmatprep.subr.mxu0 0.0
        %1054 = vmatpush1.msra.mxu0 0.0
        %1055 = vmatprep.subr.mxu0 0.0
        %1056 = vmatpush1.msra.mxu0 0.0
        %1057 = vmatprep.subr.mxu0 0.0
        %1058 = vmatpush1.msra.mxu0 0.0
        %1059 = vmatprep.subr.mxu0 0.0
        %1060 = vmatpush1.msra.mxu0 0.0
        %1061 = vmatprep.subr.mxu0 0.0
        %1062 = vmatpush1.msra.mxu0 0.0
        %1063 = vmatprep.subr.mxu0 0.0
        %1064 = vmatpush1.msra.mxu0 0.0
        %1065 = vmatprep.subr.mxu0 0.0
        %1066 = vmatpush1.msra.mxu0 0.0
        %1067 = vmatprep.subr.mxu0 0.0
        %1068 = vmatpush1.msra.mxu0 0.0
        %1069 = vmatprep.subr.mxu0 0.0
        %1070 = vmatpush1.msra.mxu0 0.0
        %1071 = vmatprep.subr.mxu0 0.0
        %1072 = vmatpush1.msra.mxu0 0.0
        %1073 = vmatprep.subr.mxu0 0.0
        %1074 = vmatpush1.msra.mxu0 0.0
        %1075 = vmatprep.subr.mxu0 0.0
        %1076 = vmatpush1.msra.mxu0 0.0
        %1077 = vmatprep.subr.mxu0 0.0
        %1078 = vmatpush1.msra.mxu0 0.0
        %1079 = vmatprep.subr.mxu0 0.0
        %1080 = vmatpush1.msra.mxu0 0.0
        %1081 = vmatprep.subr.mxu0 0.0
        %1082 = vmatpush1.msra.mxu0 0.0
        %1083 = vmatprep.subr.mxu0 0.0
        %1084 = vmatpush1.msra.mxu0 0.0
        %1085 = vmatprep.subr.mxu0 0.0
        %1086 = vmatpush1.msra.mxu0 0.0
        %1087 = vmatprep.subr.mxu0 0.0
        %1088 = vmatpush1.msra.mxu0 0.0
        %1089 = vmatprep.subr.mxu0 0.0
        %1090 = vmatpush1.msra.mxu0 0.0
        %1091 = vmatprep.subr.mxu0 0.0
        %1092 = vmatpush1.msra.mxu0 0.0
        %1093 = vmatprep.subr.mxu0 0.0
        %1094 = vmatpush1.msra.mxu0 0.0
        %1095 = vmatprep.subr.mxu0 0.0
        %1096 = vmatpush1.msra.mxu0 0.0
        %1097 = vmatprep.subr.mxu0 0.0
        %1098 = vmatpush1.msra.mxu0 0.0
        %1099 = vmatprep.mubr.f32.mxu0 0.0
        %1100 = vmatmul.mubr.f32.gmra.mrb[0].mxu0 %v1030
        %v1101 = vpop.f32.mrb[0].mxu0
        %v1102 = vadd.f32 %v1011, %v1101
        %v1103 = vpop.f32.mrb[0].mxu0
        %1104 = vmatprep.mubr.f32.mxu0 0.0
        %1105 = vmatmul.mubr.f32.gmra.mrb[0].mxu0 %v1033
        %v1106 = vpop.f32.mrb[0].mxu0
        %v1107 = vadd.f32 %v1016, %v1106
        %v1108 = vpop.f32.mrb[0].mxu0
        %1109 = vdwg.mxu0
        %v1110 = vmul.f32 %v1102, 0.5
        %v1111 = vmul.f32 %v1107, 0.5
        %v1112 = vmul.f32 %v1102, 0.70710677
        %v1113 = vmul.f32 %v1107, 0.70710677
        %v1114 = verf.f32.pop %v1112
        %v1115 = verf.f32.pop %v1113
        %v1116 = vadd.f32 %v1114, 1.0
        %v1117 = vadd.f32 %v1115, 1.0
        %v1118 = vmul.f32 %v1110, %v1116
        %v1119 = vmul.f32 %v1111, %v1117
        %v1121 = vsel %vm1028, %v895, 0
        %v1124 = vsel %vm1028, %v896, 0
        %1126 = vmatprep.subr.mxu0 0.0
        %1127 = vmatpush1.msra.mxu0 %v1118
        %1128 = vmatprep.subr.mxu0 0.0
        %1129 = vmatpush1.msra.mxu0 %v1119
        %1130 = vmatprep.subr.mxu0 0.0
        %1131 = vmatpush1.msra.mxu0 0.0
        %1132 = vmatprep.subr.mxu0 0.0
        %1133 = vmatpush1.msra.mxu0 0.0
        %1134 = vmatprep.subr.mxu0 0.0
        %1135 = vmatpush1.msra.mxu0 0.0
        %1136 = vmatprep.subr.mxu0 0.0
        %1137 = vmatpush1.msra.mxu0 0.0
        %1138 = vmatprep.subr.mxu0 0.0
        %1139 = vmatpush1.msra.mxu0 0.0
        %1140 = vmatprep.subr.mxu0 0.0
        %1141 = vmatpush1.msra.mxu0 0.0
        %1142 = vmatprep.subr.mxu0 0.0
        %1143 = vmatpush1.msra.mxu0 0.0
        %1144 = vmatprep.subr.mxu0 0.0
        %1145 = vmatpush1.msra.mxu0 0.0
        %1146 = vmatprep.subr.mxu0 0.0
        %1147 = vmatpush1.msra.mxu0 0.0
        %1148 = vmatprep.subr.mxu0 0.0
        %1149 = vmatpush1.msra.mxu0 0.0
        %1150 = vmatprep.subr.mxu0 0.0
        %1151 = vmatpush1.msra.mxu0 0.0
        %1152 = vmatprep.subr.mxu0 0.0
        %1153 = vmatpush1.msra.mxu0 0.0
        %1154 = vmatprep.subr.mxu0 0.0
        %1155 = vmatpush1.msra.mxu0 0.0
        %1156 = vmatprep.subr.mxu0 0.0
        %1157 = vmatpush1.msra.mxu0 0.0
        %1158 = vmatprep.subr.mxu0 0.0
        %1159 = vmatpush1.msra.mxu0 0.0
        %1160 = vmatprep.subr.mxu0 0.0
        %1161 = vmatpush1.msra.mxu0 0.0
        %1162 = vmatprep.subr.mxu0 0.0
        %1163 = vmatpush1.msra.mxu0 0.0
        %1164 = vmatprep.subr.mxu0 0.0
        %1165 = vmatpush1.msra.mxu0 0.0
        %1166 = vmatprep.subr.mxu0 0.0
        %1167 = vmatpush1.msra.mxu0 0.0
        %1168 = vmatprep.subr.mxu0 0.0
        %1169 = vmatpush1.msra.mxu0 0.0
        %1170 = vmatprep.subr.mxu0 0.0
        %1171 = vmatpush1.msra.mxu0 0.0
        %1172 = vmatprep.subr.mxu0 0.0
        %1173 = vmatpush1.msra.mxu0 0.0
        %1174 = vmatprep.subr.mxu0 0.0
        %1175 = vmatpush1.msra.mxu0 0.0
        %1176 = vmatprep.subr.mxu0 0.0
        %1177 = vmatpush1.msra.mxu0 0.0
        %1178 = vmatprep.subr.mxu0 0.0
        %1179 = vmatpush1.msra.mxu0 0.0
        %1180 = vmatprep.subr.mxu0 0.0
        %1181 = vmatpush1.msra.mxu0 0.0
        %1182 = vmatprep.subr.mxu0 0.0
        %1183 = vmatpush1.msra.mxu0 0.0
        %1184 = vmatprep.subr.mxu0 0.0
        %1185 = vmatpush1.msra.mxu0 0.0
        %1186 = vmatprep.subr.mxu0 0.0
        %1187 = vmatpush1.msra.mxu0 0.0
        %1188 = vmatprep.subr.mxu0 0.0
        %1189 = vmatpush1.msra.mxu0 0.0
        %1190 = vmatprep.mubr.f32.mxu0 0.0
        %1191 = vmatmul.mubr.f32.gmra.mrb[0].mxu0 %v1121
        %v1192 = vpop.f32.mrb[0].mxu0
        %v1193 = vadd.f32 %v1021, %v1192
        %v1194 = vpop.f32.mrb[0].mxu0
        %1195 = vmatprep.mubr.f32.mxu0 0.0
        %1196 = vmatmul.mubr.f32.gmra.mrb[0].mxu0 %v1124
        %v1197 = vpop.f32.mrb[0].mxu0
        %v1198 = vadd.f32 %v1026, %v1197
        %v1199 = vpop.f32.mrb[0].mxu0
        %1200 = vdwg.mxu0
        %v1201 = vadd.f32 %v885, %v1193
        %v1202 = vadd.f32 %v886, %v1198
        %1203 = vmatprep.subr.mxu0 0.0
        %1204 = vmatpush1.msra.mxu0 %v1006
        %1205 = vmatprep.subr.mxu0 0.0
        %1206 = vmatpush1.msra.mxu0 %v1007
        %1207 = vmatprep.subr.mxu0 0.0
        %1208 = vmatpush1.msra.mxu0 0.0
        %1209 = vmatprep.subr.mxu0 0.0
        %1210 = vmatpush1.msra.mxu0 0.0
        %1211 = vmatprep.subr.mxu0 0.0
        %1212 = vmatpush1.msra.mxu0 0.0
        %1213 = vmatprep.subr.mxu0 0.0
        %1214 = vmatpush1.msra.mxu0 0.0
        %1215 = vmatprep.subr.mxu0 0.0
        %1216 = vmatpush1.msra.mxu0 0.0
        %1217 = vmatprep.subr.mxu0 0.0
        %1218 = vmatpush1.msra.mxu0 0.0
        %1219 = vmatprep.subr.mxu0 0.0
        %1220 = vmatpush1.msra.mxu0 0.0
        %1221 = vmatprep.subr.mxu0 0.0
        %1222 = vmatpush1.msra.mxu0 0.0
        %1223 = vmatprep.subr.mxu0 0.0
        %1224 = vmatpush1.msra.mxu0 0.0
        %1225 = vmatprep.subr.mxu0 0.0
        %1226 = vmatpush1.msra.mxu0 0.0
        %1227 = vmatprep.subr.mxu0 0.0
        %1228 = vmatpush1.msra.mxu0 0.0
        %1229 = vmatprep.subr.mxu0 0.0
        %1230 = vmatpush1.msra.mxu0 0.0
        %1231 = vmatprep.subr.mxu0 0.0
        %1232 = vmatpush1.msra.mxu0 0.0
        %1233 = vmatprep.subr.mxu0 0.0
        %1234 = vmatpush1.msra.mxu0 0.0
        %1235 = vmatprep.subr.mxu0 0.0
        %1236 = vmatpush1.msra.mxu0 0.0
        %1237 = vmatprep.subr.mxu0 0.0
        %1238 = vmatpush1.msra.mxu0 0.0
        %1239 = vmatprep.subr.mxu0 0.0
        %1240 = vmatpush1.msra.mxu0 0.0
        %1241 = vmatprep.subr.mxu0 0.0
        %1242 = vmatpush1.msra.mxu0 0.0
        %1243 = vmatprep.subr.mxu0 0.0
        %1244 = vmatpush1.msra.mxu0 0.0
        %1245 = vmatprep.subr.mxu0 0.0
        %1246 = vmatpush1.msra.mxu0 0.0
        %1247 = vmatprep.subr.mxu0 0.0
        %1248 = vmatpush1.msra.mxu0 0.0
        %1249 = vmatprep.subr.mxu0 0.0
        %1250 = vmatpush1.msra.mxu0 0.0
        %1251 = vmatprep.subr.mxu0 0.0
        %1252 = vmatpush1.msra.mxu0 0.0
        %1253 = vmatprep.subr.mxu0 0.0
        %1254 = vmatpush1.msra.mxu0 0.0
        %1255 = vmatprep.subr.mxu0 0.0
        %1256 = vmatpush1.msra.mxu0 0.0
        %1257 = vmatprep.subr.mxu0 0.0
        %1258 = vmatpush1.msra.mxu0 0.0
        %1259 = vmatprep.subr.mxu0 0.0
        %1260 = vmatpush1.msra.mxu0 0.0
        %1261 = vmatprep.subr.mxu0 0.0
        %1262 = vmatpush1.msra.mxu0 0.0
        %1263 = vmatprep.subr.mxu0 0.0
        %1264 = vmatpush1.msra.mxu0 0.0
        %1265 = vmatprep.subr.mxu0 0.0
        %1266 = vmatpush1.msra.mxu0 0.0
        %1267 = vmatprep.mubr.f32.mxu0 0.0
        %1268 = vmatmul.mubr.f32.gmra.mrb[0].mxu0 %v1030
        %v1269 = vpop.f32.mrb[0].mxu0
        %v1270 = vadd.f32 %v1011, %v1269
        %v1271 = vpop.f32.mrb[0].mxu0
        %1272 = vmatprep.mubr.f32.mxu0 0.0
        %1273 = vmatmul.mubr.f32.gmra.mrb[0].mxu0 %v1033
        %v1274 = vpop.f32.mrb[0].mxu0
        %v1275 = vadd.f32 %v1016, %v1274
        %v1276 = vpop.f32.mrb[0].mxu0
        %1277 = vdwg.mxu0
        %v1278 = vmul.f32 %v1270, 0.5
        %v1279 = vmul.f32 %v1275, 0.5
        %v1280 = vmul.f32 %v1270, 0.70710677
        %v1281 = vmul.f32 %v1275, 0.70710677
        %v1282 = verf.f32.pop %v1280
        %v1283 = verf.f32.pop %v1281
        %v1284 = vadd.f32 %v1282, 1.0
        %v1285 = vadd.f32 %v1283, 1.0
        %v1286 = vmul.f32 %v1278, %v1284
        %v1287 = vmul.f32 %v1279, %v1285
        %1288 = vmatprep.subr.mxu0 0.0
        %1289 = vmatpush1.msra.mxu0 %v1286
        %1290 = vmatprep.subr.mxu0 0.0
        %1291 = vmatpush1.msra.mxu0 %v1287
        %1292 = vmatprep.subr.mxu0 0.0
        %1293 = vmatpush1.msra.mxu0 0.0
        %1294 = vmatprep.subr.mxu0 0.0
        %1295 = vmatpush1.msra.mxu0 0.0
        %1296 = vmatprep.subr.mxu0 0.0
        %1297 = vmatpush1.msra.mxu0 0.0
        %1298 = vmatprep.subr.mxu0 0.0
        %1299 = vmatpush1.msra.mxu0 0.0
        %1300 = vmatprep.subr.mxu0 0.0
        %1301 = vmatpush1.msra.mxu0 0.0
        %1302 = vmatprep.subr.mxu0 0.0
        %1303 = vmatpush1.msra.mxu0 0.0
        %1304 = vmatprep.subr.mxu0 0.0
        %1305 = vmatpush1.msra.mxu0 0.0
        %1306 = vmatprep.subr.mxu0 0.0
        %1307 = vmatpush1.msra.mxu0 0.0
        %1308 = vmatprep.subr.mxu0 0.0
        %1309 = vmatpush1.msra.mxu0 0.0
        %1310 = vmatprep.subr.mxu0 0.0
        %1311 = vmatpush1.msra.mxu0 0.0
        %1312 = vmatprep.subr.mxu0 0.0
        %1313 = vmatpush1.msra.mxu0 0.0
        %1314 = vmatprep.subr.mxu0 0.0
        %1315 = vmatpush1.msra.mxu0 0.0
        %1316 = vmatprep.subr.mxu0 0.0
        %1317 = vmatpush1.msra.mxu0 0.0
        %1318 = vmatprep.subr.mxu0 0.0
        %1319 = vmatpush1.msra.mxu0 0.0
        %1320 = vmatprep.subr.mxu0 0.0
        %1321 = vmatpush1.msra.mxu0 0.0
        %1322 = vmatprep.subr.mxu0 0.0
        %1323 = vmatpush1.msra.mxu0 0.0
        %1324 = vmatprep.subr.mxu0 0.0
        %1325 = vmatpush1.msra.mxu0 0.0
        %1326 = vmatprep.subr.mxu0 0.0
        %1327 = vmatpush1.msra.mxu0 0.0
        %1328 = vmatprep.subr.mxu0 0.0
        %1329 = vmatpush1.msra.mxu0 0.0
        %1330 = vmatprep.subr.mxu0 0.0
        %1331 = vmatpush1.msra.mxu0 0.0
        %1332 = vmatprep.subr.mxu0 0.0
        %1333 = vmatpush1.msra.mxu0 0.0
        %1334 = vmatprep.subr.mxu0 0.0
        %1335 = vmatpush1.msra.mxu0 0.0
        %1336 = vmatprep.subr.mxu0 0.0
        %1337 = vmatpush1.msra.mxu0 0.0
        %1338 = vmatprep.subr.mxu0 0.0
        %1339 = vmatpush1.msra.mxu0 0.0
        %1340 = vmatprep.subr.mxu0 0.0
        %1341 = vmatpush1.msra.mxu0 0.0
        %1342 = vmatprep.subr.mxu0 0.0
        %1343 = vmatpush1.msra.mxu0 0.0
        %1344 = vmatprep.subr.mxu0 0.0
        %1345 = vmatpush1.msra.mxu0 0.0
        %1346 = vmatprep.subr.mxu0 0.0
        %1347 = vmatpush1.msra.mxu0 0.0
        %1348 = vmatprep.subr.mxu0 0.0
        %1349 = vmatpush1.msra.mxu0 0.0
        %1350 = vmatprep.subr.mxu0 0.0
        %1351 = vmatpush1.msra.mxu0 0.0
        %1352 = vmatprep.mubr.f32.mxu0 0.0
        %1353 = vmatmul.mubr.f32.gmra.mrb[0].mxu0 %v1121
        %v1354 = vpop.f32.mrb[0].mxu0
        %v1355 = vadd.f32 %v1021, %v1354
        %v1356 = vpop.f32.mrb[0].mxu0
        %1357 = vmatprep.mubr.f32.mxu0 0.0
        %1358 = vmatmul.mubr.f32.gmra.mrb[0].mxu0 %v1124
        %v1359 = vpop.f32.mrb[0].mxu0
        %v1360 = vadd.f32 %v1026, %v1359
        %v1361 = vpop.f32.mrb[0].mxu0
        %1362 = vdwg.mxu0
        %v1363 = vadd.f32 %v887, %v1355
        %v1364 = vadd.f32 %v888, %v1360
        %v1365 = vsel %vm923, %v1201, 0.0
        %1366 = vadd.xlane.f32.xlu0 %v1365
        %v1367 = vpop.xlane.xlu0 %1366
        %v1368 = vsel %vm923, %v1202, 0.0
        %1369 = vadd.xlane.f32.xlu0 %v1368
        %v1370 = vpop.xlane.xlu0 %1369
        %v1371 = vsel %vm923, %v1363, 0.0
        %1372 = vadd.xlane.f32.xlu0 %v1371
        %v1373 = vpop.xlane.xlu0 %1372
        %v1374 = vsel %vm923, %v1364, 0.0
        %1375 = vadd.xlane.f32.xlu0 %v1374
        %v1376 = vpop.xlane.xlu0 %1375
        %v1377 = vmul.f32 %v1201, %v1201
        %v1378 = vmul.f32 %v1202, %v1202
        %v1379 = vmul.f32 %v1363, %v1363
        %v1380 = vmul.f32 %v1364, %v1364
        %v1381 = vsel %vm923, %v1377, 0.0
        %1382 = vadd.xlane.f32.xlu0 %v1381
        %v1383 = vpop.xlane.xlu0 %1382
        %v1384 = vsel %vm923, %v1378, 0.0
        %1385 = vadd.xlane.f32.xlu0 %v1384
        %v1386 = vpop.xlane.xlu0 %1385
        %v1387 = vsel %vm923, %v1379, 0.0
        %1388 = vadd.xlane.f32.xlu0 %v1387
        %v1389 = vpop.xlane.xlu0 %1388
        %v1390 = vsel %vm923, %v1380, 0.0
        %1391 = vadd.xlane.f32.xlu0 %v1390
        %v1392 = vpop.xlane.xlu0 %1391
        %v1393 = vmul.f32 %v1367, 0.03125
        %v1394 = vmul.f32 %v1370, 0.03125
        %v1395 = vmul.f32 %v1373, 0.03125
        %v1396 = vmul.f32 %v1376, 0.03125
        %v1397 = vmul.f32 %v1383, 0.03125
        %v1398 = vmul.f32 %v1386, 0.03125
        %v1399 = vmul.f32 %v1389, 0.03125
        %v1400 = vmul.f32 %v1392, 0.03125
        %v1401 = vmul.f32 %v1393, %v1393
        %v1402 = vmul.f32 %v1394, %v1394
        %v1403 = vmul.f32 %v1395, %v1395
        %v1404 = vmul.f32 %v1396, %v1396
        %v1405 = vsub.f32 %v1397, %v1401
        %v1406 = vsub.f32 %v1398, %v1402
        %v1407 = vsub.f32 %v1399, %v1403
        %v1408 = vsub.f32 %v1400, %v1404
        %v1409 = vmax.f32 %v1405, 0.0
        %v1410 = vmax.f32 %v1406, 0.0
        %v1411 = vmax.f32 %v1407, 0.0
        %v1412 = vmax.f32 %v1408, 0.0
        %v1413 = vsub.f32 %v1201, %v1393
        %v1414 = vsub.f32 %v1202, %v1394
        %v1415 = vsub.f32 %v1363, %v1395
        %v1416 = vsub.f32 %v1364, %v1396
        %v1417 = vadd.f32 %v1409, 1e-05
        %v1418 = vadd.f32 %v1410, 1e-05
        %v1419 = vadd.f32 %v1411, 1e-05
        %v1420 = vadd.f32 %v1412, 1e-05
        %v1421 = vrsqrt.pop %v1417
        %v1422 = vrsqrt.pop %v1418
        %v1423 = vrsqrt.pop %v1419
        %v1424 = vrsqrt.pop %v1420
        %v1425 = vmul.f32 %v1413, %v1421
        %v1426 = vmul.f32 %v1414, %v1422
        %v1427 = vmul.f32 %v1415, %v1423
        %v1428 = vmul.f32 %v1416, %v1424
        %v1430 = vlaneseq
        %v1431 = vshrl.u32 %v1430, 7
        %v1432 = vsub.s32 0, %v1431
        %v1433 = vrot.slane %v891, %v1432
        %v1435 = vmul.f32 %v1425, %v1433
        %v1436 = vmul.f32 %v1426, %v1433
        %v1437 = vmul.f32 %v1427, %v1433
        %v1438 = vmul.f32 %v1428, %v1433
        %v1440 = vlaneseq
        %v1441 = vshrl.u32 %v1440, 7
        %v1442 = vsub.s32 0, %v1441
        %v1443 = vrot.slane %v892, %v1442
        %v1445 = vadd.f32 %v1435, %v1443
        %v1446 = vadd.f32 %v1436, %v1443
        %v1447 = vadd.f32 %v1437, %v1443
        %v1448 = vadd.f32 %v1438, %v1443
        %v1450 = vlaneseq
        %v1451 = vshrl.u32 %v1450, 7
        %v1452 = vsub.s32 0, %v1451
        %v1453 = vrot.slane %v905, %v1452
        %v1456 = vsel %vm923, %v1445, 0
        %v1459 = vsel %vm923, %v1446, 0
        %v1462 = vsel %vm923, %v1447, 0
        %v1465 = vsel %vm923, %v1448, 0
        %1467 = vmatprep.subr.mxu0 0.0
        %1468 = vmatpush1.msra.mxu0 %v901
        %1469 = vmatprep.subr.mxu0 0.0
        %1470 = vmatpush1.msra.mxu0 %v902
        %1471 = vmatprep.subr.mxu0 0.0
        %1472 = vmatpush1.msra.mxu0 %v903
        %1473 = vmatprep.subr.mxu0 0.0
        %1474 = vmatpush1.msra.mxu0 %v904
        %1475 = vmatprep.subr.mxu0 0.0
        %1476 = vmatpush1.msra.mxu0 0.0
        %1477 = vmatprep.subr.mxu0 0.0
        %1478 = vmatpush1.msra.mxu0 0.0
        %1479 = vmatprep.subr.mxu0 0.0
        %1480 = vmatpush1.msra.mxu0 0.0
        %1481 = vmatprep.subr.mxu0 0.0
        %1482 = vmatpush1.msra.mxu0 0.0
        %1483 = vmatprep.subr.mxu0 0.0
        %1484 = vmatpush1.msra.mxu0 0.0
        %1485 = vmatprep.subr.mxu0 0.0
        %1486 = vmatpush1.msra.mxu0 0.0
        %1487 = vmatprep.subr.mxu0 0.0
        %1488 = vmatpush1.msra.mxu0 0.0
        %1489 = vmatprep.subr.mxu0 0.0
        %1490 = vmatpush1.msra.mxu0 0.0
        %1491 = vmatprep.subr.mxu0 0.0
        %1492 = vmatpush1.msra.mxu0 0.0
        %1493 = vmatprep.subr.mxu0 0.0
        %1494 = vmatpush1.msra.mxu0 0.0
        %1495 = vmatprep.subr.mxu0 0.0
        %1496 = vmatpush1.msra.mxu0 0.0
        %1497 = vmatprep.subr.mxu0 0.0
        %1498 = vmatpush1.msra.mxu0 0.0
        %1499 = vmatprep.subr.mxu0 0.0
        %1500 = vmatpush1.msra.mxu0 0.0
        %1501 = vmatprep.subr.mxu0 0.0
        %1502 = vmatpush1.msra.mxu0 0.0
        %1503 = vmatprep.subr.mxu0 0.0
        %1504 = vmatpush1.msra.mxu0 0.0
        %1505 = vmatprep.subr.mxu0 0.0
        %1506 = vmatpush1.msra.mxu0 0.0
        %1507 = vmatprep.subr.mxu0 0.0
        %1508 = vmatpush1.msra.mxu0 0.0
        %1509 = vmatprep.subr.mxu0 0.0
        %1510 = vmatpush1.msra.mxu0 0.0
        %1511 = vmatprep.subr.mxu0 0.0
        %1512 = vmatpush1.msra.mxu0 0.0
        %1513 = vmatprep.subr.mxu0 0.0
        %1514 = vmatpush1.msra.mxu0 0.0
        %1515 = vmatprep.subr.mxu0 0.0
        %1516 = vmatpush1.msra.mxu0 0.0
        %1517 = vmatprep.subr.mxu0 0.0
        %1518 = vmatpush1.msra.mxu0 0.0
        %1519 = vmatprep.subr.mxu0 0.0
        %1520 = vmatpush1.msra.mxu0 0.0
        %1521 = vmatprep.subr.mxu0 0.0
        %1522 = vmatpush1.msra.mxu0 0.0
        %1523 = vmatprep.subr.mxu0 0.0
        %1524 = vmatpush1.msra.mxu0 0.0
        %1525 = vmatprep.subr.mxu0 0.0
        %1526 = vmatpush1.msra.mxu0 0.0
        %1527 = vmatprep.subr.mxu0 0.0
        %1528 = vmatpush1.msra.mxu0 0.0
        %1529 = vmatprep.subr.mxu0 0.0
        %1530 = vmatpush1.msra.mxu0 0.0
        %1531 = vmatprep.mubr.f32.mxu0 0.0
        %1532 = vmatmul.mubr.f32.gmra.mrb[0].mxu0 %v1456
        %v1533 = vpop.f32.mrb[0].mxu0
        %v1534 = vadd.f32 %v1453, %v1533
        %v1535 = vpop.f32.mrb[0].mxu0
        %1536 = vmatprep.mubr.f32.mxu0 0.0
        %1537 = vmatmul.mubr.f32.gmra.mrb[0].mxu0 %v1459
        %v1538 = vpop.f32.mrb[0].mxu0
        %v1539 = vadd.f32 %v1453, %v1538
        %v1540 = vpop.f32.mrb[0].mxu0
        %1541 = vmatprep.mubr.f32.mxu0 0.0
        %1542 = vmatmul.mubr.f32.gmra.mrb[0].mxu0 %v1462
        %v1543 = vpop.f32.mrb[0].mxu0
        %v1544 = vadd.f32 %v1453, %v1543
        %v1545 = vpop.f32.mrb[0].mxu0
        %1546 = vmatprep.mubr.f32.mxu0 0.0
        %1547 = vmatmul.mubr.f32.gmra.mrb[0].mxu0 %v1465
        %v1548 = vpop.f32.mrb[0].mxu0
        %v1549 = vadd.f32 %v1453, %v1548
        %v1550 = vpop.f32.mrb[0].mxu0
        %1551 = vdwg.mxu0
        %v1552 = vmul.f32 %v1534, 0.5
        %v1553 = vmul.f32 %v1539, 0.5
        %v1554 = vmul.f32 %v1544, 0.5
        %v1555 = vmul.f32 %v1549, 0.5
        %v1556 = vmul.f32 %v1534, 0.70710677
        %v1557 = vmul.f32 %v1539, 0.70710677
        %v1558 = vmul.f32 %v1544, 0.70710677
        %v1559 = vmul.f32 %v1549, 0.70710677
        %v1560 = verf.f32.pop %v1556
        %v1561 = verf.f32.pop %v1557
        %v1562 = verf.f32.pop %v1558
        %v1563 = verf.f32.pop %v1559
        %v1564 = vadd.f32 %v1560, 1.0
        %v1565 = vadd.f32 %v1561, 1.0
        %v1566 = vadd.f32 %v1562, 1.0
        %v1567 = vadd.f32 %v1563, 1.0
        %v1568 = vmul.f32 %v1552, %v1564
        %v1569 = vmul.f32 %v1553, %v1565
        %v1570 = vmul.f32 %v1554, %v1566
        %v1571 = vmul.f32 %v1555, %v1567
        %v1573 = vlaneseq
        %v1574 = vshrl.u32 %v1573, 7
        %v1575 = vsub.s32 0, %v1574
        %v1576 = vrot.slane %v922, %v1575
        %1578 = vmatprep.subr.mxu0 0.0
        %1579 = vmatpush1.msra.mxu0 %v906
        %1580 = vmatprep.subr.mxu0 0.0
        %1581 = vmatpush1.msra.mxu0 %v907
        %1582 = vmatprep.subr.mxu0 0.0
        %1583 = vmatpush1.msra.mxu0 %v908
        %1584 = vmatprep.subr.mxu0 0.0
        %1585 = vmatpush1.msra.mxu0 %v909
        %1586 = vmatprep.subr.mxu0 0.0
        %1587 = vmatpush1.msra.mxu0 %v910
        %1588 = vmatprep.subr.mxu0 0.0
        %1589 = vmatpush1.msra.mxu0 %v911
        %1590 = vmatprep.subr.mxu0 0.0
        %1591 = vmatpush1.msra.mxu0 %v912
        %1592 = vmatprep.subr.mxu0 0.0
        %1593 = vmatpush1.msra.mxu0 %v913
        %1594 = vmatprep.subr.mxu0 0.0
        %1595 = vmatpush1.msra.mxu0 %v914
        %1596 = vmatprep.subr.mxu0 0.0
        %1597 = vmatpush1.msra.mxu0 %v915
        %1598 = vmatprep.subr.mxu0 0.0
        %1599 = vmatpush1.msra.mxu0 %v916
        %1600 = vmatprep.subr.mxu0 0.0
        %1601 = vmatpush1.msra.mxu0 %v917
        %1602 = vmatprep.subr.mxu0 0.0
        %1603 = vmatpush1.msra.mxu0 %v918
        %1604 = vmatprep.subr.mxu0 0.0
        %1605 = vmatpush1.msra.mxu0 %v919
        %1606 = vmatprep.subr.mxu0 0.0
        %1607 = vmatpush1.msra.mxu0 %v920
        %1608 = vmatprep.subr.mxu0 0.0
        %1609 = vmatpush1.msra.mxu0 %v921
        %1610 = vmatprep.subr.mxu0 0.0
        %1611 = vmatpush1.msra.mxu0 0.0
        %1612 = vmatprep.subr.mxu0 0.0
        %1613 = vmatpush1.msra.mxu0 0.0
        %1614 = vmatprep.subr.mxu0 0.0
        %1615 = vmatpush1.msra.mxu0 0.0
        %1616 = vmatprep.subr.mxu0 0.0
        %1617 = vmatpush1.msra.mxu0 0.0
        %1618 = vmatprep.subr.mxu0 0.0
        %1619 = vmatpush1.msra.mxu0 0.0
        %1620 = vmatprep.subr.mxu0 0.0
        %1621 = vmatpush1.msra.mxu0 0.0
        %1622 = vmatprep.subr.mxu0 0.0
        %1623 = vmatpush1.msra.mxu0 0.0
        %1624 = vmatprep.subr.mxu0 0.0
        %1625 = vmatpush1.msra.mxu0 0.0
        %1626 = vmatprep.subr.mxu0 0.0
        %1627 = vmatpush1.msra.mxu0 0.0
        %1628 = vmatprep.subr.mxu0 0.0
        %1629 = vmatpush1.msra.mxu0 0.0
        %1630 = vmatprep.subr.mxu0 0.0
        %1631 = vmatpush1.msra.mxu0 0.0
        %1632 = vmatprep.subr.mxu0 0.0
        %1633 = vmatpush1.msra.mxu0 0.0
        %1634 = vmatprep.subr.mxu0 0.0
        %1635 = vmatpush1.msra.mxu0 0.0
        %1636 = vmatprep.subr.mxu0 0.0
        %1637 = vmatpush1.msra.mxu0 0.0
        %1638 = vmatprep.subr.mxu0 0.0
        %1639 = vmatpush1.msra.mxu0 0.0
        %1640 = vmatprep.subr.mxu0 0.0
        %1641 = vmatpush1.msra.mxu0 0.0
        %1642 = vmatprep.mubr.f32.mxu0 0.0
        %1643 = vmatmul.mubr.f32.gmra.mrb[0].mxu0 %v1568
        %v1644 = vpop.f32.mrb[0].mxu0
        %v1645 = vadd.f32 %v1576, %v1644
        %v1646 = vpop.f32.mrb[0].mxu0
        %1647 = vmatprep.mubr.f32.mxu0 0.0
        %1648 = vmatmul.mubr.f32.gmra.mrb[0].mxu0 %v1569
        %v1649 = vpop.f32.mrb[0].mxu0
        %v1650 = vadd.f32 %v1576, %v1649
        %v1651 = vpop.f32.mrb[0].mxu0
        %1652 = vmatprep.mubr.f32.mxu0 0.0
        %1653 = vmatmul.mubr.f32.gmra.mrb[0].mxu0 %v1570
        %v1654 = vpop.f32.mrb[0].mxu0
        %v1655 = vadd.f32 %v1576, %v1654
        %v1656 = vpop.f32.mrb[0].mxu0
        %1657 = vmatprep.mubr.f32.mxu0 0.0
        %1658 = vmatmul.mubr.f32.gmra.mrb[0].mxu0 %v1571
        %v1659 = vpop.f32.mrb[0].mxu0
        %v1660 = vadd.f32 %v1576, %v1659
        %v1661 = vpop.f32.mrb[0].mxu0
        %1662 = vdwg.mxu0
        %v1663 = vadd.f32 %v1201, %v1645
        %v1664 = vadd.f32 %v1202, %v1650
        %v1665 = vadd.f32 %v1363, %v1655
        %v1666 = vadd.f32 %v1364, %v1660
        %p1667 = scmp.lt.s32.totalorder %s34, 1
        // Predicated region
        $region93: #{tpu_custom_call.1} parent=87 // pred_check
          %p1668 = pneg %p1667
        $region94: #{tpu_custom_call.1} parent=87 // pred_check_branch
          %1670 = sbr.rel (%p1668) target = $region96
        $region95: #{tpu_custom_call.1} parent=87 // pred_region
          %1671 = vst.msk [vmem:[#allocation2] sm:$0xff] %vm923, %v1663
          %1672 = vst.msk [vmem:[#allocation2 + $0x8] sm:$0xff] %vm923, %v1664
          %1673 = vst.msk [vmem:[#allocation2 + $0x10] sm:$0xff] %vm923, %v1665
          %1674 = vst.msk [vmem:[#allocation2 + $0x18] sm:$0xff] %vm923, %v1666
        $region96: #{tpu_custom_call.1} parent=87 // pred_fallthru
          _
        %p1675 = scmp.eq.s32.totalorder %s34, 1
        // Predicated region
        $region97: #{tpu_custom_call.1} parent=87 // pred_check
          %p1676 = pneg %p1675
        $region98: #{tpu_custom_call.1} parent=87 // pred_check_branch
          %1678 = sbr.rel (%p1676) target = $region100
        $region99: #{tpu_custom_call.1} parent=87 // pred_region
          %v1679 = vsel %vm923, %v1663, 0.0
          %v1680 = vsel %vm923, %v1664, 0.0
          %v1681 = vadd.f32 %v1679, %v1680
          %v1682 = vrot.slane %v1681, 4
          %v1683 = vadd.f32 %v1681, %v1682
          %v1684 = vrot.slane %v1683, 2
          %v1685 = vadd.f32 %v1683, %v1684
          %v1686 = vrot.slane %v1685, 1
          %v1687 = vadd.f32 %v1685, %v1686
          %v1688 = vsel %vm923, %v1665, 0.0
          %v1689 = vsel %vm923, %v1666, 0.0
          %v1690 = vadd.f32 %v1688, %v1689
          %v1691 = vrot.slane %v1690, 4
          %v1692 = vadd.f32 %v1690, %v1691
          %v1693 = vrot.slane %v1692, 2
          %v1694 = vadd.f32 %v1692, %v1693
          %v1695 = vrot.slane %v1694, 1
          %v1696 = vadd.f32 %v1694, %v1695
          %v1697 = vrcp.pop 16.0
          %v1698 = vmul.f32 %v1687, %v1697
          %v1699 = vmul.f32 %v1696, %v1697
          %v1700 = vld [vmem:[%s15] sm:$0xff]
          %v1701 = vld [vmem:[%s15 + $0x8] sm:$0xff]
          %v1702 = vld [vmem:[%s15 + $0x10] sm:$0xff]
          %v1703 = vld [vmem:[%s15 + $0x18] sm:$0xff]
          %v1704 = vld [vmem:[%s16] sm:$0x1]
          %v1706 = vlaneseq
          %v1707 = vshrl.u32 %v1706, 7
          %v1708 = vsub.s32 0, %v1707
          %v1709 = vrot.slane %v1704, %v1708
          %vm1713 = vcmask 1041409
          %v1714 = vsel %vm1713, %v1699, %v1698
          %v1715 = vsel %vm923, %v1714, 0
          %1717 = vmatprep.subr.mxu0 0.0
          %1718 = vmatpush1.msra.mxu0 %v1700
          %1719 = vmatprep.subr.mxu0 0.0
          %1720 = vmatpush1.msra.mxu0 %v1701
          %1721 = vmatprep.subr.mxu0 0.0
          %1722 = vmatpush1.msra.mxu0 %v1702
          %1723 = vmatprep.subr.mxu0 0.0
          %1724 = vmatpush1.msra.mxu0 %v1703
          %1725 = vmatprep.subr.mxu0 0.0
          %1726 = vmatpush1.msra.mxu0 0.0
          %1727 = vmatprep.subr.mxu0 0.0
          %1728 = vmatpush1.msra.mxu0 0.0
          %1729 = vmatprep.subr.mxu0 0.0
          %1730 = vmatpush1.msra.mxu0 0.0
          %1731 = vmatprep.subr.mxu0 0.0
          %1732 = vmatpush1.msra.mxu0 0.0
          %1733 = vmatprep.subr.mxu0 0.0
          %1734 = vmatpush1.msra.mxu0 0.0
          %1735 = vmatprep.subr.mxu0 0.0
          %1736 = vmatpush1.msra.mxu0 0.0
          %1737 = vmatprep.subr.mxu0 0.0
          %1738 = vmatpush1.msra.mxu0 0.0
          %1739 = vmatprep.subr.mxu0 0.0
          %1740 = vmatpush1.msra.mxu0 0.0
          %1741 = vmatprep.subr.mxu0 0.0
          %1742 = vmatpush1.msra.mxu0 0.0
          %1743 = vmatprep.subr.mxu0 0.0
          %1744 = vmatpush1.msra.mxu0 0.0
          %1745 = vmatprep.subr.mxu0 0.0
          %1746 = vmatpush1.msra.mxu0 0.0
          %1747 = vmatprep.subr.mxu0 0.0
          %1748 = vmatpush1.msra.mxu0 0.0
          %1749 = vmatprep.subr.mxu0 0.0
          %1750 = vmatpush1.msra.mxu0 0.0
          %1751 = vmatprep.subr.mxu0 0.0
          %1752 = vmatpush1.msra.mxu0 0.0
          %1753 = vmatprep.subr.mxu0 0.0
          %1754 = vmatpush1.msra.mxu0 0.0
          %1755 = vmatprep.subr.mxu0 0.0
          %1756 = vmatpush1.msra.mxu0 0.0
          %1757 = vmatprep.subr.mxu0 0.0
          %1758 = vmatpush1.msra.mxu0 0.0
          %1759 = vmatprep.subr.mxu0 0.0
          %1760 = vmatpush1.msra.mxu0 0.0
          %1761 = vmatprep.subr.mxu0 0.0
          %1762 = vmatpush1.msra.mxu0 0.0
          %1763 = vmatprep.subr.mxu0 0.0
          %1764 = vmatpush1.msra.mxu0 0.0
          %1765 = vmatprep.subr.mxu0 0.0
          %1766 = vmatpush1.msra.mxu0 0.0
          %1767 = vmatprep.subr.mxu0 0.0
          %1768 = vmatpush1.msra.mxu0 0.0
          %1769 = vmatprep.subr.mxu0 0.0
          %1770 = vmatpush1.msra.mxu0 0.0
          %1771 = vmatprep.subr.mxu0 0.0
          %1772 = vmatpush1.msra.mxu0 0.0
          %1773 = vmatprep.subr.mxu0 0.0
          %1774 = vmatpush1.msra.mxu0 0.0
          %1775 = vmatprep.subr.mxu0 0.0
          %1776 = vmatpush1.msra.mxu0 0.0
          %1777 = vmatprep.subr.mxu0 0.0
          %1778 = vmatpush1.msra.mxu0 0.0
          %1779 = vmatprep.subr.mxu0 0.0
          %1780 = vmatpush1.msra.mxu0 0.0
          %1781 = vmatprep.mubr.f32.mxu0 0.0
          %1782 = vmatmul.mubr.f32.gmra.mrb[0].mxu0 %v1715
          %v1783 = vpop.f32.mrb[0].mxu0
          %v1784 = vadd.f32 %v1709, %v1783
          %v1785 = vpop.f32.mrb[0].mxu0
          %1786 = vdwg.mxu0
          %vm1787 = vcmask 74752
          %1788 = vst.msk [vmem:[#allocation3] sm:$0x3] %vm1787, %v1784
        $region100: #{tpu_custom_call.1} parent=87 // pred_fallthru
          _
        // Predicated region
        $region101: #{tpu_custom_call.1} parent=87 // pred_check
          %p1789 = pneg %p481
        $region102: #{tpu_custom_call.1} parent=87 // pred_check_branch
          %1791 = sbr.rel (%p1789) target = $region104
        $region103: #{tpu_custom_call.1} parent=87 // pred_region
          %s1793 = ssub.s32 32, 32
          %1794 = vsyncadd [#allocation4], %s1793
          %s1795 = smul.addr %s33, 32
          %s1796 = scalar_lea.hbm %s17, %s1795
          %s1798 = sshll.u32 [#allocation3], 4
          %s1799 = int_to_ptr.vmem [resolvable:$true] %s1798
          %1801 = dma.vmem_to_hbm [thread:$0]  %s1799, 32, %s1796, [#allocation4]
        $region104: #{tpu_custom_call.1} parent=87 // pred_fallthru
          _
        // Predicated region
        $region105: #{tpu_custom_call.1} parent=87 // pred_check
          %p1802 = pneg %p481
        $region106: #{tpu_custom_call.1} parent=87 // pred_check_branch
          %1804 = sbr.rel (%p1802) target = $region108
        $region107: #{tpu_custom_call.1} parent=87 // pred_region
          %1805 = dma.done [#allocation4], 32
        $region108: #{tpu_custom_call.1} parent=87 // pred_fallthru
          _
      $region88: #{tpu_custom_call.1} parent=5 // pred_fallthru
        _
      %p1806 = scmp.le.s32.totalorder 2, %s24
      // Predicated region
      $region109: #{tpu_custom_call.1} parent=5 // pred_check
        %p1807 = pneg %p1806
      $region110: #{tpu_custom_call.1} parent=5 // pred_check_branch
        %1809 = sbr.rel (%p1807) target = $region112
      $region111: #{tpu_custom_call.1} parent=5 // pred_region
        %s1810 = ssub.s32 %s24, 2
      $region112: #{tpu_custom_call.1} parent=5 // pred_fallthru
        _
    $region6: #{tpu_custom_call.1} parent=1 // loop_footer
      %s28 = sadd.s32 1, %s24
    $region7: #{tpu_custom_call.1} parent=1 // loop_footer_branch
      %23 = sbr.rel target = $region3
    $region8: #{tpu_custom_call.1} parent=1 // loop_exit
      _
    %1811 = vsyncpa [#allocation4], 1
    %s1812 = scalar_lea.sflag [#allocation4], 1
    %1813 = vsyncpa %s1812, 1

</llo_original>
